<compile_context>
chip_gen: v5e
topology: v5e:2x2
jax: 0.10.0
libtpu: 0.0.40
codegen_flags: <defaults>
</compile_context>

<pallas_src>
import functools

import jax
import jax.numpy as jnp
from jax.experimental import pallas as pl
from jax.experimental.pallas import tpu as pltpu


def _round_up(x, m):
    return ((x + m - 1) // m) * m


# ----------------------------------------------------------------------------
# Fused Pallas kernel: normalize -> conv3x3 -> conv3x3 -> conv3x3 -> merged 1x1 heads
# ----------------------------------------------------------------------------
def _fused_rpn_kernel(inmask_ref, outmask_ref, x_ref, mean_ref, invstd_ref,
                      w1_ref, b1_ref, w2_ref, b2_ref, w3_ref, b3_ref,
                      hwT_ref, hb_ref,
                      out_ref,
                      p1, p2,
                      *, H, W, B, Lbuf):
    Wp = W + 2
    M = (B - 1) * Lbuf + H * Wp          # flattened conv-output positions (incl. garbage cols)
    BL = B * Lbuf
    offsets = tuple(dy * Wp + dx for dy in range(3) for dx in range(3))
    lo = Wp + 1                          # lane shift: conv output (y,x) -> padded interior (y+1,x+1)
    hi = lo + M

    outmask = outmask_ref[...]           # (1, M) 1.0 at valid output positions, 0.0 at garbage

    def conv3x3(load_tap, w_ref, b_ref):
        # im2col: 9 contiguous lane windows stacked on the channel (sublane) axis,
        # then ONE MXU dot with K = 9*Cin and f32 accumulation.
        cols = jnp.concatenate([load_tap(off) for off in offsets], axis=0)   # (9*Cin, M)
        acc = jax.lax.dot_general(
            w_ref[...], cols,
            dimension_numbers=(((1,), (0,)), ((), ())),
            preferred_element_type=jnp.float32)                              # (Cout, M)
        # bias + relu, then mask garbage columns (they become the zero halo downstream)
        return jnp.maximum(acc + b_ref[...], 0.0) * outmask

    def store_padded(p_ref, feat):
        # One contiguous lane-shifted store builds the next zero-padded buffer; only the two
        # uncovered strips need explicit zeroing (halo-only zeroing, no full-buffer memset).
        cz = p_ref.shape[0]
        p_ref[:, 0:lo] = jnp.zeros((cz, lo), p_ref.dtype)
        p_ref[:, lo:hi] = feat.astype(p_ref.dtype)
        p_ref[:, hi:BL] = jnp.zeros((cz, BL - hi), p_ref.dtype)

    # Fused per-channel normalization of the pre-zero-padded raw image.  Cast from the HBM
    # dtype happens here (no wrapper-side astype); the interior mask forces the halo and the
    # flattened tail back to exactly zero (SAME padding of the *normalized* image).
    xn = (x_ref[0].astype(jnp.float32) - mean_ref[...]) * invstd_ref[...]
    xn = xn * inmask_ref[...]                                                # (Cin_pad, BL) f32

    # Backbone conv1 (f32 operands, tiny K), conv2 / RPN conv (bf16 operands) — all
    # intermediates stay in VMEM in the same lane-dense padded layout.
    f1 = conv3x3(lambda o: xn[:, o:o + M], w1_ref, b1_ref)
    store_padded(p1, f1)
    p1v = p1[...]                                                            # (Cf, BL) bf16
    f2 = conv3x3(lambda o: p1v[:, o:o + M], w2_ref, b2_ref)
    store_padded(p2, f2)
    p2v = p2[...]
    t = conv3x3(lambda o: p2v[:, o:o + M], w3_ref, b3_ref)                   # (Cf, M) f32

    # Merged 1x1 objectness + anchor-delta heads: one bf16 MXU dot, lane-dense (16, M) output.
    head = jax.lax.dot_general(
        hwT_ref[...], t.astype(jnp.bfloat16),
        dimension_numbers=(((1,), (0,)), ((), ())),
        preferred_element_type=jnp.float32) + hb_ref[...]                    # (16, M)
    out_ref[...] = head[None].astype(out_ref.dtype)


def _conv_w_to_matmul(w, cin_pad=None, dtype=jnp.float32):
    """(3,3,Cin,Cout) conv weight -> (Cout, 9*Cin) im2col weight (tap-major, cin-minor rows)."""
    kh, kw, cin, cout = w.shape
    if cin_pad is not None and cin_pad > cin:
        w = jnp.pad(w, ((0, 0), (0, 0), (0, cin_pad - cin), (0, 0)))
        cin = cin_pad
    return jnp.transpose(w, (3, 0, 1, 2)).reshape(cout, kh * kw * cin).astype(dtype)


def fused_rpn_heads(images_nchw, pixel_mean, pixel_std, params, num_anchors,
                    images_per_step=None):
    """Fused normalize+backbone+RPN-head chain; returns (N, 16, H, W) merged head tensor."""
    N, Cin, H, W = images_nchw.shape
    Cf = params["bb1_w"].shape[3]
    A = num_anchors
    c_head = 5 * A                                  # obj (A) + deltas (4A)
    c_head_pad = 16                                 # clean sublane multiple
    Hp, Wp = H + 2, W + 2
    Cin_pad = _round_up(max(Cin, 1), 8)
    Lbuf = _round_up(Hp * Wp + 2, 128)              # per-image flattened padded length (lanes)

    # Images per grid step: amortize the ~0.35us/step overhead but keep >= 2 grid steps so
    # both v7x TensorCores get work from the "parallel" batch axis.
    if images_per_step is None:
        images_per_step = 1
        for cand in range(max(N // 2, 1), 0, -1):
            if N % cand == 0:
                images_per_step = cand
                break
    B = images_per_step
    assert N % B == 0
    Ngrid = N // B
    BL = B * Lbuf
    M = (B - 1) * Lbuf + H * Wp

    # --- input: zero halo pre-baked, channels on sublanes, padded flattened space on lanes,
    #     B images per grid step packed along lanes with stride Lbuf, original HBM dtype ----
    x = jnp.pad(images_nchw, ((0, 0), (0, 0), (1, 1), (1, 1)))        # (N, Cin, Hp, Wp)
    x = x.reshape(N, Cin, Hp * Wp)
    x = jnp.pad(x, ((0, 0), (0, Cin_pad - Cin), (0, Lbuf - Hp * Wp)))  # (N, Cin_pad, Lbuf)
    x = x.reshape(Ngrid, B, Cin_pad, Lbuf).transpose(0, 2, 1, 3).reshape(Ngrid, Cin_pad, BL)

    mean = jnp.pad(pixel_mean.reshape(Cin, 1).astype(jnp.float32),
                   ((0, Cin_pad - Cin), (0, 0)))
    invstd = jnp.pad((1.0 / pixel_std).reshape(Cin, 1).astype(jnp.float32),
                     ((0, Cin_pad - Cin), (0, 0)))

    # Interior mask (padded-buffer layout) and valid-output mask (conv-output layout).
    l = jnp.arange(Lbuf)
    r, c = l // Wp, l % Wp
    inmask = ((r >= 1) & (r <= H) & (c >= 1) & (c <= W)).astype(jnp.float32)
    inmask = jnp.tile(inmask, (B,)).reshape(1, BL)
    o = jnp.arange(M) % Lbuf
    outmask = (((o // Wp) < H) & ((o % Wp) < W)).astype(jnp.float32).reshape(1, M)

    # --- weights: im2col layout; bf16 MXU operands for the wide convs and the merged head ---
    w1 = _conv_w_to_matmul(params["bb1_w"], cin_pad=Cin_pad, dtype=jnp.float32)
    w2 = _conv_w_to_matmul(params["bb2_w"], dtype=jnp.bfloat16)
    w3 = _conv_w_to_matmul(params["rpn_w"], dtype=jnp.bfloat16)
    b1 = params["bb1_b"].reshape(Cf, 1).astype(jnp.float32)
    b2 = params["bb2_b"].reshape(Cf, 1).astype(jnp.float32)
    b3 = params["rpn_b"].reshape(Cf, 1).astype(jnp.float32)

    obj_w = params["obj_w"].reshape(Cf, A)
    del_w = params["del_w"].reshape(Cf, 4 * A)
    hw = jnp.concatenate([obj_w, del_w], axis=1)                      # (Cf, 15)
    hw = jnp.pad(hw, ((0, 0), (0, c_head_pad - c_head)))              # (Cf, 16)
    hwT = jnp.transpose(hw).astype(jnp.bfloat16)                      # (16, Cf)
    hb = jnp.concatenate(
        [params["obj_b"], params["del_b"],
         jnp.zeros((c_head_pad - c_head,), jnp.float32)]).reshape(c_head_pad, 1)

    itemsize = jnp.dtype(images_nchw.dtype).itemsize
    flops = 2 * N * H * W * (9 * Cin_pad * Cf + 2 * 9 * Cf * Cf + Cf * c_head_pad)
    bytes_accessed = (N * Cin_pad * Lbuf * itemsize
                      + (w1.size + b1.size + b2.size + b3.size + hb.size) * 4
                      + (w2.size + w3.size + hwT.size) * 2
                      + Ngrid * c_head_pad * M * 4)

    kernel = functools.partial(_fused_rpn_kernel, H=H, W=W, B=B, Lbuf=Lbuf)
    out = pl.pallas_call(
        kernel,
        out_shape=jax.ShapeDtypeStruct((Ngrid, c_head_pad, M), jnp.float32),
        grid=(Ngrid,),
        in_specs=[
            pl.BlockSpec((1, BL), lambda n: (0, 0)),                  # interior mask
            pl.BlockSpec((1, M), lambda n: (0, 0)),                   # valid-output mask
            pl.BlockSpec((1, Cin_pad, BL), lambda n: (n, 0, 0)),      # images (raw dtype)
            pl.BlockSpec((Cin_pad, 1), lambda n: (0, 0)),             # pixel mean
            pl.BlockSpec((Cin_pad, 1), lambda n: (0, 0)),             # 1 / pixel std
            pl.BlockSpec((Cf, 9 * Cin_pad), lambda n: (0, 0)),        # bb1 im2col weight (f32)
            pl.BlockSpec((Cf, 1), lambda n: (0, 0)),                  # bb1 bias
            pl.BlockSpec((Cf, 9 * Cf), lambda n: (0, 0)),             # bb2 im2col weight (bf16)
            pl.BlockSpec((Cf, 1), lambda n: (0, 0)),                  # bb2 bias
            pl.BlockSpec((Cf, 9 * Cf), lambda n: (0, 0)),             # rpn im2col weight (bf16)
            pl.BlockSpec((Cf, 1), lambda n: (0, 0)),                  # rpn bias
            pl.BlockSpec((c_head_pad, Cf), lambda n: (0, 0)),         # merged head weight^T
            pl.BlockSpec((c_head_pad, 1), lambda n: (0, 0)),          # merged head bias
        ],
        out_specs=pl.BlockSpec((1, c_head_pad, M), lambda n: (n, 0, 0)),
        scratch_shapes=[
            pltpu.VMEM((Cf, BL), jnp.bfloat16),                       # padded bb1 output
            pltpu.VMEM((Cf, BL), jnp.bfloat16),                       # padded bb2 output
        ],
        compiler_params=pltpu.CompilerParams(
            dimension_semantics=("parallel",)),
        cost_estimate=pl.CostEstimate(flops=int(flops), transcendentals=0,
                                      bytes_accessed=int(bytes_accessed)),
    )(inmask, outmask, x, mean, invstd, w1, b1, w2, b2, w3, b3, hwT, hb)

    # Tiny glue: drop the per-row garbage columns / per-image lane segments.
    segs = [out[:, :, b * Lbuf: b * Lbuf + H * Wp] for b in range(B)]  # (Ngrid, 16, H*Wp)
    out = jnp.stack(segs, axis=1).reshape(N, c_head_pad, H, Wp)[..., :W]
    return out                                                         # (N, 16, H, W)


# ----------------------------------------------------------------------------
# Synthetic backbone + RPN parameters (deterministic, __init__-style shapes)
# ----------------------------------------------------------------------------
def init_params(key, c_in=3, c_feat=32, num_anchors=3):
    ks = jax.random.split(key, 5)
    return {
        # backbone: two 3x3 convs (stride 1, size_divisibility = 1)
        "bb1_w": 0.01 * jax.random.normal(ks[0], (3, 3, c_in, c_feat), jnp.float32),
        "bb1_b": jnp.zeros((c_feat,), jnp.float32),
        "bb2_w": 0.01 * jax.random.normal(ks[1], (3, 3, c_feat, c_feat), jnp.float32),
        "bb2_b": jnp.zeros((c_feat,), jnp.float32),
        # RPN head: 3x3 conv, 1x1 objectness, 1x1 anchor deltas
        "rpn_w": 0.01 * jax.random.normal(ks[2], (3, 3, c_feat, c_feat), jnp.float32),
        "rpn_b": jnp.zeros((c_feat,), jnp.float32),
        "obj_w": 0.01 * jax.random.normal(ks[3], (1, 1, c_feat, num_anchors), jnp.float32),
        "obj_b": jnp.zeros((num_anchors,), jnp.float32),
        "del_w": 0.01 * jax.random.normal(ks[4], (1, 1, c_feat, num_anchors * 4), jnp.float32),
        "del_b": jnp.zeros((num_anchors * 4,), jnp.float32),
    }


def generate_anchors(H, W, sizes=(8.0, 16.0, 32.0), stride=1.0):
    """Square anchors (aspect ratio 1) centered on each feature location."""
    ys = (jnp.arange(H, dtype=jnp.float32) + 0.5) * stride
    xs = (jnp.arange(W, dtype=jnp.float32) + 0.5) * stride
    cy, cx = jnp.meshgrid(ys, xs, indexing="ij")
    cy = cy[..., None]
    cx = cx[..., None]
    half = jnp.asarray(sizes, jnp.float32).reshape(1, 1, -1) / 2.0
    x1 = cx - half
    y1 = cy - half
    x2 = cx + half
    y2 = cy + half
    return jnp.stack([x1, y1, x2, y2], axis=-1).reshape(-1, 4)   # (H*W*A, 4)


def apply_deltas(anchors, deltas):
    """Faster R-CNN Box2BoxTransform.apply_deltas, batched over leading dims of `deltas`."""
    widths = anchors[:, 2] - anchors[:, 0]
    heights = anchors[:, 3] - anchors[:, 1]
    ctr_x = anchors[:, 0] + 0.5 * widths
    ctr_y = anchors[:, 1] + 0.5 * heights
    dx, dy, dw, dh = deltas[..., 0], deltas[..., 1], deltas[..., 2], deltas[..., 3]
    scale_clamp = jnp.log(1000.0 / 16.0)
    dw = jnp.minimum(dw, scale_clamp)
    dh = jnp.minimum(dh, scale_clamp)
    pred_ctr_x = dx * widths + ctr_x
    pred_ctr_y = dy * heights + ctr_y
    pred_w = jnp.exp(dw) * widths
    pred_h = jnp.exp(dh) * heights
    return jnp.stack(
        [pred_ctr_x - 0.5 * pred_w, pred_ctr_y - 0.5 * pred_h,
         pred_ctr_x + 0.5 * pred_w, pred_ctr_y + 0.5 * pred_h], axis=-1)


# ----------------------------------------------------------------------------
# ProposalNetwork.forward equivalent
# ----------------------------------------------------------------------------
@functools.partial(jax.jit, static_argnames=("num_anchors", "pre_topk"))
def _proposal_network_core(params, images_nchw, pixel_mean, pixel_std,
                           num_anchors=3, pre_topk=64):
    N, C, H, W = images_nchw.shape

    # 1-3) normalize + backbone + RPN head, all inside ONE fused Pallas kernel.
    head = fused_rpn_heads(images_nchw, pixel_mean, pixel_std, params, num_anchors)

    A = num_anchors
    # objectness channels [0, A), delta channels [A, 5A) — (h*W + w)*A + a flattening order.
    obj_logits = jnp.transpose(head[:, :A], (0, 2, 3, 1)).reshape(N, H * W * A)
    deltas = jnp.transpose(head[:, A:5 * A], (0, 2, 3, 1)).reshape(N, H * W * A, 4)

    # 4) decode proposals (batched glue), clip to image, batched top-k.
    anchors = generate_anchors(H, W)                     # (H*W*A, 4)
    boxes = apply_deltas(anchors, deltas)                # (N, H*W*A, 4)
    lo = jnp.zeros((4,), jnp.float32)
    hi = jnp.asarray([W, H, W, H], jnp.float32)
    boxes = jnp.clip(boxes, lo, hi)

    k = min(pre_topk, obj_logits.shape[1])
    top_logits, top_idx = jax.lax.top_k(obj_logits, k)                   # (N, k)
    top_boxes = jnp.take_along_axis(boxes, top_idx[..., None], axis=1)   # (N, k, 4)
    # TODO(synk): NMS on proposals has no clean Pallas equivalent; top-k only here.
    return top_boxes, top_logits


def proposal_network_forward(params, images_nchw, pixel_mean, pixel_std,
                             num_anchors=3, pre_topk=64):
    top_boxes, top_logits = _proposal_network_core(
        params, images_nchw, pixel_mean, pixel_std,
        num_anchors=num_anchors, pre_topk=pre_topk)
    N = images_nchw.shape[0]
    return [{"proposals": {"proposal_boxes": top_boxes[i],
                           "objectness_logits": top_logits[i]}} for i in range(N)]


# ----------------------------------------------------------------------------
if __name__ == "__main__":
    key = jax.random.PRNGKey(0)
    k_img, k_par = jax.random.split(key)

    N, C, H, W = 2, 3, 16, 16
    # batched_inputs analogue: a stacked batch of NCHW images (kept in their HBM dtype)
    images = jax.random.uniform(k_img, (N, C, H, W), jnp.float32, 0.0, 255.0)

    pixel_mean = jnp.asarray([103.53, 116.28, 123.675], jnp.float32)
    pixel_std = jnp.asarray([57.375, 57.12, 58.395], jnp.float32)

    params = init_params(k_par, c_in=C, c_feat=32, num_anchors=3)

    results = proposal_network_forward(params, images, pixel_mean, pixel_std)

    for r in results:
        jax.block_until_ready(r["proposals"]["proposal_boxes"])
        jax.block_until_ready(r["proposals"]["objectness_logits"])

    # light sanity checks on shapes / finiteness
    assert results[0]["proposals"]["proposal_boxes"].shape == (64, 4)
    assert results[0]["proposals"]["objectness_logits"].shape == (64,)
    assert bool(jnp.all(jnp.isfinite(results[0]["proposals"]["proposal_boxes"])))
    assert bool(jnp.all(jnp.isfinite(results[0]["proposals"]["objectness_logits"])))
    print("KERNEL_OK")
</pallas_src>

<mosaic_0001>
module attributes {stable_mosaic.version = 11 : i64} {
  func.func @_fused_rpn_kernel(%arg0: i32, %arg1: memref<1x384xf32, #tpu.memory_space<vmem>>, %arg2: memref<1x288xf32, #tpu.memory_space<vmem>>, %arg3: memref<1x8x384xf32, #tpu.memory_space<vmem>>, %arg4: memref<8x1xf32, #tpu.memory_space<vmem>>, %arg5: memref<8x1xf32, #tpu.memory_space<vmem>>, %arg6: memref<32x72xf32, #tpu.memory_space<vmem>>, %arg7: memref<32x1xf32, #tpu.memory_space<vmem>>, %arg8: memref<32x288xbf16, #tpu.memory_space<vmem>>, %arg9: memref<32x1xf32, #tpu.memory_space<vmem>>, %arg10: memref<32x288xbf16, #tpu.memory_space<vmem>>, %arg11: memref<32x1xf32, #tpu.memory_space<vmem>>, %arg12: memref<16x32xbf16, #tpu.memory_space<vmem>>, %arg13: memref<16x1xf32, #tpu.memory_space<vmem>>, %arg14: memref<1x16x288xf32, #tpu.memory_space<vmem>>, %arg15: memref<32x384xbf16, #tpu.memory_space<vmem>>, %arg16: memref<32x384xbf16, #tpu.memory_space<vmem>>) attributes {dimension_semantics = [#tpu.dimension_semantics<parallel>], iteration_bounds = array<i64: 2>, scalar_prefetch = 0 : i64, scratch_operands = 2 : i64, tpu.core_type = #tpu.core_type<tc>, window_params = [{pipeline_mode = #tpu.pipeline_mode<synchronous>, transform_indices = @transform_0, window_bounds = array<i64: 1, 384>}, {pipeline_mode = #tpu.pipeline_mode<synchronous>, transform_indices = @transform_1, window_bounds = array<i64: 1, 288>}, {transform_indices = @transform_2, window_bounds = array<i64: 1, 8, 384>}, {pipeline_mode = #tpu.pipeline_mode<synchronous>, transform_indices = @transform_3, window_bounds = array<i64: 8, 1>}, {pipeline_mode = #tpu.pipeline_mode<synchronous>, transform_indices = @transform_4, window_bounds = array<i64: 8, 1>}, {pipeline_mode = #tpu.pipeline_mode<synchronous>, transform_indices = @transform_5, window_bounds = array<i64: 32, 72>}, {pipeline_mode = #tpu.pipeline_mode<synchronous>, transform_indices = @transform_6, window_bounds = array<i64: 32, 1>}, {pipeline_mode = #tpu.pipeline_mode<synchronous>, transform_indices = @transform_7, window_bounds = array<i64: 32, 288>}, {pipeline_mode = #tpu.pipeline_mode<synchronous>, transform_indices = @transform_8, window_bounds = array<i64: 32, 1>}, {pipeline_mode = #tpu.pipeline_mode<synchronous>, transform_indices = @transform_9, window_bounds = array<i64: 32, 288>}, {pipeline_mode = #tpu.pipeline_mode<synchronous>, transform_indices = @transform_10, window_bounds = array<i64: 32, 1>}, {pipeline_mode = #tpu.pipeline_mode<synchronous>, transform_indices = @transform_11, window_bounds = array<i64: 16, 32>}, {pipeline_mode = #tpu.pipeline_mode<synchronous>, transform_indices = @transform_12, window_bounds = array<i64: 16, 1>}, {transform_indices = @transform_13, window_bounds = array<i64: 1, 16, 288>}]} {
    %c0 = arith.constant 0 : index
    %c0_0 = arith.constant 0 : index
    %0 = vector.load %arg2[%c0, %c0_0] : memref<1x288xf32, #tpu.memory_space<vmem>>, vector<1x288xf32>
    %c0_1 = arith.constant 0 : index
    %c0_2 = arith.constant 0 : index
    %c0_3 = arith.constant 0 : index
    %1 = vector.load %arg3[%c0_1, %c0_2, %c0_3] : memref<1x8x384xf32, #tpu.memory_space<vmem>>, vector<1x8x384xf32>
    %2 = vector.shape_cast %1 : vector<1x8x384xf32> to vector<8x384xf32>
    %c0_4 = arith.constant 0 : index
    %c0_5 = arith.constant 0 : index
    %3 = vector.load %arg4[%c0_4, %c0_5] : memref<8x1xf32, #tpu.memory_space<vmem>>, vector<8x1xf32>
    %4 = vector.broadcast %3 : vector<8x1xf32> to vector<8x384xf32>
    %5 = arith.subf %2, %4 : vector<8x384xf32>
    %c0_6 = arith.constant 0 : index
    %c0_7 = arith.constant 0 : index
    %6 = vector.load %arg5[%c0_6, %c0_7] : memref<8x1xf32, #tpu.memory_space<vmem>>, vector<8x1xf32>
    %7 = vector.broadcast %6 : vector<8x1xf32> to vector<8x384xf32>
    %8 = arith.mulf %5, %7 : vector<8x384xf32>
    %c0_8 = arith.constant 0 : index
    %c0_9 = arith.constant 0 : index
    %9 = vector.load %arg1[%c0_8, %c0_9] : memref<1x384xf32, #tpu.memory_space<vmem>>, vector<1x384xf32>
    %10 = vector.broadcast %9 : vector<1x384xf32> to vector<8x384xf32>
    %11 = arith.mulf %8, %10 : vector<8x384xf32>
    %12 = vector.extract_strided_slice %11 {offsets = [0, 0], sizes = [8, 288], strides = [1, 1]} : vector<8x384xf32> to vector<8x288xf32>
    %13 = vector.extract_strided_slice %11 {offsets = [0, 1], sizes = [8, 288], strides = [1, 1]} : vector<8x384xf32> to vector<8x288xf32>
    %14 = vector.extract_strided_slice %11 {offsets = [0, 2], sizes = [8, 288], strides = [1, 1]} : vector<8x384xf32> to vector<8x288xf32>
    %15 = vector.extract_strided_slice %11 {offsets = [0, 18], sizes = [8, 288], strides = [1, 1]} : vector<8x384xf32> to vector<8x288xf32>
    %16 = vector.extract_strided_slice %11 {offsets = [0, 19], sizes = [8, 288], strides = [1, 1]} : vector<8x384xf32> to vector<8x288xf32>
    %17 = vector.extract_strided_slice %11 {offsets = [0, 20], sizes = [8, 288], strides = [1, 1]} : vector<8x384xf32> to vector<8x288xf32>
    %18 = vector.extract_strided_slice %11 {offsets = [0, 36], sizes = [8, 288], strides = [1, 1]} : vector<8x384xf32> to vector<8x288xf32>
    %19 = vector.extract_strided_slice %11 {offsets = [0, 37], sizes = [8, 288], strides = [1, 1]} : vector<8x384xf32> to vector<8x288xf32>
    %20 = vector.extract_strided_slice %11 {offsets = [0, 38], sizes = [8, 288], strides = [1, 1]} : vector<8x384xf32> to vector<8x288xf32>
    %21 = tpu.concatenate %12, %13, %14, %15, %16, %17, %18, %19, %20 in 0 : vector<8x288xf32>, vector<8x288xf32>, vector<8x288xf32>, vector<8x288xf32>, vector<8x288xf32>, vector<8x288xf32>, vector<8x288xf32>, vector<8x288xf32>, vector<8x288xf32> -> vector<72x288xf32>
    %c0_10 = arith.constant 0 : index
    %c0_11 = arith.constant 0 : index
    %22 = vector.load %arg6[%c0_10, %c0_11] : memref<32x72xf32, #tpu.memory_space<vmem>>, vector<32x72xf32>
    %cst = arith.constant dense<0.000000e+00> : vector<32x288xf32>
    %23 = tpu.matmul %22, %21, %cst {dimension_numbers = #tpu.dot_dimension_numbers<[1], [0], [0], [1], [0, 0, 1, 1], [], []>} : vector<32x72xf32>, vector<72x288xf32>, vector<32x288xf32> -> vector<32x288xf32>
    %c0_12 = arith.constant 0 : index
    %c0_13 = arith.constant 0 : index
    %24 = vector.load %arg7[%c0_12, %c0_13] : memref<32x1xf32, #tpu.memory_space<vmem>>, vector<32x1xf32>
    %25 = vector.broadcast %24 : vector<32x1xf32> to vector<32x288xf32>
    %26 = arith.addf %23, %25 : vector<32x288xf32>
    %cst_14 = arith.constant 0.000000e+00 : f32
    %27 = vector.broadcast %cst_14 : f32 to vector<32x288xf32>
    %28 = arith.maximumf %26, %27 : vector<32x288xf32>
    %29 = vector.broadcast %0 : vector<1x288xf32> to vector<32x288xf32>
    %30 = arith.mulf %28, %29 : vector<32x288xf32>
    %cst_15 = arith.constant 0.000000e+00 : bf16
    %31 = vector.broadcast %cst_15 : bf16 to vector<32x19xbf16>
    %c0_16 = arith.constant 0 : index
    %c0_17 = arith.constant 0 : index
    %32 = vector.load %arg15[%c0_16, %c0_17] : memref<32x384xbf16, #tpu.memory_space<vmem>>, vector<32x19xbf16>
    tpu.vector_store %arg15[%c0_16, %c0_17], %31 {strides = array<i32>} : memref<32x384xbf16, #tpu.memory_space<vmem>>, vector<32x19xbf16>,
    %33 = arith.truncf %30 : vector<32x288xf32> to vector<32x288xbf16>
    %c0_18 = arith.constant 0 : index
    %c19 = arith.constant 19 : index
    %34 = vector.load %arg15[%c0_18, %c19] : memref<32x384xbf16, #tpu.memory_space<vmem>>, vector<32x288xbf16>
    tpu.vector_store %arg15[%c0_18, %c19], %33 {strides = array<i32>} : memref<32x384xbf16, #tpu.memory_space<vmem>>, vector<32x288xbf16>,
    %cst_19 = arith.constant 0.000000e+00 : bf16
    %35 = vector.broadcast %cst_19 : bf16 to vector<32x77xbf16>
    %c0_20 = arith.constant 0 : index
    %c307 = arith.constant 307 : index
    %36 = vector.load %arg15[%c0_20, %c307] : memref<32x384xbf16, #tpu.memory_space<vmem>>, vector<32x77xbf16>
    tpu.vector_store %arg15[%c0_20, %c307], %35 {strides = array<i32>} : memref<32x384xbf16, #tpu.memory_space<vmem>>, vector<32x77xbf16>,
    %c0_21 = arith.constant 0 : index
    %c0_22 = arith.constant 0 : index
    %37 = vector.load %arg15[%c0_21, %c0_22] : memref<32x384xbf16, #tpu.memory_space<vmem>>, vector<32x384xbf16>
    %38 = vector.extract_strided_slice %37 {offsets = [0, 0], sizes = [32, 288], strides = [1, 1]} : vector<32x384xbf16> to vector<32x288xbf16>
    %39 = vector.extract_strided_slice %37 {offsets = [0, 1], sizes = [32, 288], strides = [1, 1]} : vector<32x384xbf16> to vector<32x288xbf16>
    %40 = vector.extract_strided_slice %37 {offsets = [0, 2], sizes = [32, 288], strides = [1, 1]} : vector<32x384xbf16> to vector<32x288xbf16>
    %41 = vector.extract_strided_slice %37 {offsets = [0, 18], sizes = [32, 288], strides = [1, 1]} : vector<32x384xbf16> to vector<32x288xbf16>
    %42 = vector.extract_strided_slice %37 {offsets = [0, 19], sizes = [32, 288], strides = [1, 1]} : vector<32x384xbf16> to vector<32x288xbf16>
    %43 = vector.extract_strided_slice %37 {offsets = [0, 20], sizes = [32, 288], strides = [1, 1]} : vector<32x384xbf16> to vector<32x288xbf16>
    %44 = vector.extract_strided_slice %37 {offsets = [0, 36], sizes = [32, 288], strides = [1, 1]} : vector<32x384xbf16> to vector<32x288xbf16>
    %45 = vector.extract_strided_slice %37 {offsets = [0, 37], sizes = [32, 288], strides = [1, 1]} : vector<32x384xbf16> to vector<32x288xbf16>
    %46 = vector.extract_strided_slice %37 {offsets = [0, 38], sizes = [32, 288], strides = [1, 1]} : vector<32x384xbf16> to vector<32x288xbf16>
    %47 = tpu.concatenate %38, %39, %40, %41, %42, %43, %44, %45, %46 in 0 : vector<32x288xbf16>, vector<32x288xbf16>, vector<32x288xbf16>, vector<32x288xbf16>, vector<32x288xbf16>, vector<32x288xbf16>, vector<32x288xbf16>, vector<32x288xbf16>, vector<32x288xbf16> -> vector<288x288xbf16>
    %c0_23 = arith.constant 0 : index
    %c0_24 = arith.constant 0 : index
    %48 = vector.load %arg8[%c0_23, %c0_24] : memref<32x288xbf16, #tpu.memory_space<vmem>>, vector<32x288xbf16>
    %cst_25 = arith.constant dense<0.000000e+00> : vector<32x288xf32>
    %49 = tpu.matmul %48, %47, %cst_25 {dimension_numbers = #tpu.dot_dimension_numbers<[1], [0], [0], [1], [0, 0, 1, 1], [], []>} : vector<32x288xbf16>, vector<288x288xbf16>, vector<32x288xf32> -> vector<32x288xf32>
    %c0_26 = arith.constant 0 : index
    %c0_27 = arith.constant 0 : index
    %50 = vector.load %arg9[%c0_26, %c0_27] : memref<32x1xf32, #tpu.memory_space<vmem>>, vector<32x1xf32>
    %51 = vector.broadcast %50 : vector<32x1xf32> to vector<32x288xf32>
    %52 = arith.addf %49, %51 : vector<32x288xf32>
    %cst_28 = arith.constant 0.000000e+00 : f32
    %53 = vector.broadcast %cst_28 : f32 to vector<32x288xf32>
    %54 = arith.maximumf %52, %53 : vector<32x288xf32>
    %55 = vector.broadcast %0 : vector<1x288xf32> to vector<32x288xf32>
    %56 = arith.mulf %54, %55 : vector<32x288xf32>
    %cst_29 = arith.constant 0.000000e+00 : bf16
    %57 = vector.broadcast %cst_29 : bf16 to vector<32x19xbf16>
    %c0_30 = arith.constant 0 : index
    %c0_31 = arith.constant 0 : index
    %58 = vector.load %arg16[%c0_30, %c0_31] : memref<32x384xbf16, #tpu.memory_space<vmem>>, vector<32x19xbf16>
    tpu.vector_store %arg16[%c0_30, %c0_31], %57 {strides = array<i32>} : memref<32x384xbf16, #tpu.memory_space<vmem>>, vector<32x19xbf16>,
    %59 = arith.truncf %56 : vector<32x288xf32> to vector<32x288xbf16>
    %c0_32 = arith.constant 0 : index
    %c19_33 = arith.constant 19 : index
    %60 = vector.load %arg16[%c0_32, %c19_33] : memref<32x384xbf16, #tpu.memory_space<vmem>>, vector<32x288xbf16>
    tpu.vector_store %arg16[%c0_32, %c19_33], %59 {strides = array<i32>} : memref<32x384xbf16, #tpu.memory_space<vmem>>, vector<32x288xbf16>,
    %cst_34 = arith.constant 0.000000e+00 : bf16
    %61 = vector.broadcast %cst_34 : bf16 to vector<32x77xbf16>
    %c0_35 = arith.constant 0 : index
    %c307_36 = arith.constant 307 : index
    %62 = vector.load %arg16[%c0_35, %c307_36] : memref<32x384xbf16, #tpu.memory_space<vmem>>, vector<32x77xbf16>
    tpu.vector_store %arg16[%c0_35, %c307_36], %61 {strides = array<i32>} : memref<32x384xbf16, #tpu.memory_space<vmem>>, vector<32x77xbf16>,
    %c0_37 = arith.constant 0 : index
    %c0_38 = arith.constant 0 : index
    %63 = vector.load %arg16[%c0_37, %c0_38] : memref<32x384xbf16, #tpu.memory_space<vmem>>, vector<32x384xbf16>
    %64 = vector.extract_strided_slice %63 {offsets = [0, 0], sizes = [32, 288], strides = [1, 1]} : vector<32x384xbf16> to vector<32x288xbf16>
    %65 = vector.extract_strided_slice %63 {offsets = [0, 1], sizes = [32, 288], strides = [1, 1]} : vector<32x384xbf16> to vector<32x288xbf16>
    %66 = vector.extract_strided_slice %63 {offsets = [0, 2], sizes = [32, 288], strides = [1, 1]} : vector<32x384xbf16> to vector<32x288xbf16>
    %67 = vector.extract_strided_slice %63 {offsets = [0, 18], sizes = [32, 288], strides = [1, 1]} : vector<32x384xbf16> to vector<32x288xbf16>
    %68 = vector.extract_strided_slice %63 {offsets = [0, 19], sizes = [32, 288], strides = [1, 1]} : vector<32x384xbf16> to vector<32x288xbf16>
    %69 = vector.extract_strided_slice %63 {offsets = [0, 20], sizes = [32, 288], strides = [1, 1]} : vector<32x384xbf16> to vector<32x288xbf16>
    %70 = vector.extract_strided_slice %63 {offsets = [0, 36], sizes = [32, 288], strides = [1, 1]} : vector<32x384xbf16> to vector<32x288xbf16>
    %71 = vector.extract_strided_slice %63 {offsets = [0, 37], sizes = [32, 288], strides = [1, 1]} : vector<32x384xbf16> to vector<32x288xbf16>
    %72 = vector.extract_strided_slice %63 {offsets = [0, 38], sizes = [32, 288], strides = [1, 1]} : vector<32x384xbf16> to vector<32x288xbf16>
    %73 = tpu.concatenate %64, %65, %66, %67, %68, %69, %70, %71, %72 in 0 : vector<32x288xbf16>, vector<32x288xbf16>, vector<32x288xbf16>, vector<32x288xbf16>, vector<32x288xbf16>, vector<32x288xbf16>, vector<32x288xbf16>, vector<32x288xbf16>, vector<32x288xbf16> -> vector<288x288xbf16>
    %c0_39 = arith.constant 0 : index
    %c0_40 = arith.constant 0 : index
    %74 = vector.load %arg10[%c0_39, %c0_40] : memref<32x288xbf16, #tpu.memory_space<vmem>>, vector<32x288xbf16>
    %cst_41 = arith.constant dense<0.000000e+00> : vector<32x288xf32>
    %75 = tpu.matmul %74, %73, %cst_41 {dimension_numbers = #tpu.dot_dimension_numbers<[1], [0], [0], [1], [0, 0, 1, 1], [], []>} : vector<32x288xbf16>, vector<288x288xbf16>, vector<32x288xf32> -> vector<32x288xf32>
    %c0_42 = arith.constant 0 : index
    %c0_43 = arith.constant 0 : index
    %76 = vector.load %arg11[%c0_42, %c0_43] : memref<32x1xf32, #tpu.memory_space<vmem>>, vector<32x1xf32>
    %77 = vector.broadcast %76 : vector<32x1xf32> to vector<32x288xf32>
    %78 = arith.addf %75, %77 : vector<32x288xf32>
    %cst_44 = arith.constant 0.000000e+00 : f32
    %79 = vector.broadcast %cst_44 : f32 to vector<32x288xf32>
    %80 = arith.maximumf %78, %79 : vector<32x288xf32>
    %81 = vector.broadcast %0 : vector<1x288xf32> to vector<32x288xf32>
    %82 = arith.mulf %80, %81 : vector<32x288xf32>
    %c0_45 = arith.constant 0 : index
    %c0_46 = arith.constant 0 : index
    %83 = vector.load %arg12[%c0_45, %c0_46] : memref<16x32xbf16, #tpu.memory_space<vmem>>, vector<16x32xbf16>
    %84 = arith.truncf %82 : vector<32x288xf32> to vector<32x288xbf16>
    %cst_47 = arith.constant dense<0.000000e+00> : vector<16x288xf32>
    %85 = tpu.matmul %83, %84, %cst_47 {dimension_numbers = #tpu.dot_dimension_numbers<[1], [0], [0], [1], [0, 0, 1, 1], [], []>} : vector<16x32xbf16>, vector<32x288xbf16>, vector<16x288xf32> -> vector<16x288xf32>
    %c0_48 = arith.constant 0 : index
    %c0_49 = arith.constant 0 : index
    %86 = vector.load %arg13[%c0_48, %c0_49] : memref<16x1xf32, #tpu.memory_space<vmem>>, vector<16x1xf32>
    %87 = vector.broadcast %86 : vector<16x1xf32> to vector<16x288xf32>
    %88 = arith.addf %85, %87 : vector<16x288xf32>
    %89 = vector.shape_cast %88 : vector<16x288xf32> to vector<1x16x288xf32>
    %c0_50 = arith.constant 0 : index
    %c0_51 = arith.constant 0 : index
    %c0_52 = arith.constant 0 : index
    %90 = vector.load %arg14[%c0_50, %c0_51, %c0_52] : memref<1x16x288xf32, #tpu.memory_space<vmem>>, vector<1x16x288xf32>
    tpu.vector_store %arg14[%c0_50, %c0_51, %c0_52], %89 {strides = array<i32>} : memref<1x16x288xf32, #tpu.memory_space<vmem>>, vector<1x16x288xf32>,
    return
  }
  func.func @transform_0(%arg0: i32) -> (i32, i32) {
    %c0_i32 = arith.constant 0 : i32
    %c0_i32_0 = arith.constant 0 : i32
    %c0_i32_1 = arith.constant 0 : i32
    return %c0_i32, %c0_i32_0 : i32, i32
  }
  func.func @transform_1(%arg0: i32) -> (i32, i32) {
    %c0_i32 = arith.constant 0 : i32
    %c0_i32_0 = arith.constant 0 : i32
    %c0_i32_1 = arith.constant 0 : i32
    return %c0_i32, %c0_i32_0 : i32, i32
  }
  func.func @transform_2(%arg0: i32) -> (i32, i32, i32) {
    %c0_i32 = arith.constant 0 : i32
    %c0_i32_0 = arith.constant 0 : i32
    %c0_i32_1 = arith.constant 0 : i32
    return %arg0, %c0_i32, %c0_i32_0 : i32, i32, i32
  }
  func.func @transform_3(%arg0: i32) -> (i32, i32) {
    %c0_i32 = arith.constant 0 : i32
    %c0_i32_0 = arith.constant 0 : i32
    %c0_i32_1 = arith.constant 0 : i32
    return %c0_i32, %c0_i32_0 : i32, i32
  }
  func.func @transform_4(%arg0: i32) -> (i32, i32) {
    %c0_i32 = arith.constant 0 : i32
    %c0_i32_0 = arith.constant 0 : i32
    %c0_i32_1 = arith.constant 0 : i32
    return %c0_i32, %c0_i32_0 : i32, i32
  }
  func.func @transform_5(%arg0: i32) -> (i32, i32) {
    %c0_i32 = arith.constant 0 : i32
    %c0_i32_0 = arith.constant 0 : i32
    %c0_i32_1 = arith.constant 0 : i32
    return %c0_i32, %c0_i32_0 : i32, i32
  }
  func.func @transform_6(%arg0: i32) -> (i32, i32) {
    %c0_i32 = arith.constant 0 : i32
    %c0_i32_0 = arith.constant 0 : i32
    %c0_i32_1 = arith.constant 0 : i32
    return %c0_i32, %c0_i32_0 : i32, i32
  }
  func.func @transform_7(%arg0: i32) -> (i32, i32) {
    %c0_i32 = arith.constant 0 : i32
    %c0_i32_0 = arith.constant 0 : i32
    %c0_i32_1 = arith.constant 0 : i32
    return %c0_i32, %c0_i32_0 : i32, i32
  }
  func.func @transform_8(%arg0: i32) -> (i32, i32) {
    %c0_i32 = arith.constant 0 : i32
    %c0_i32_0 = arith.constant 0 : i32
    %c0_i32_1 = arith.constant 0 : i32
    return %c0_i32, %c0_i32_0 : i32, i32
  }
  func.func @transform_9(%arg0: i32) -> (i32, i32) {
    %c0_i32 = arith.constant 0 : i32
    %c0_i32_0 = arith.constant 0 : i32
    %c0_i32_1 = arith.constant 0 : i32
    return %c0_i32, %c0_i32_0 : i32, i32
  }
  func.func @transform_10(%arg0: i32) -> (i32, i32) {
    %c0_i32 = arith.constant 0 : i32
    %c0_i32_0 = arith.constant 0 : i32
    %c0_i32_1 = arith.constant 0 : i32
    return %c0_i32, %c0_i32_0 : i32, i32
  }
  func.func @transform_11(%arg0: i32) -> (i32, i32) {
    %c0_i32 = arith.constant 0 : i32
    %c0_i32_0 = arith.constant 0 : i32
    %c0_i32_1 = arith.constant 0 : i32
    return %c0_i32, %c0_i32_0 : i32, i32
  }
  func.func @transform_12(%arg0: i32) -> (i32, i32) {
    %c0_i32 = arith.constant 0 : i32
    %c0_i32_0 = arith.constant 0 : i32
    %c0_i32_1 = arith.constant 0 : i32
    return %c0_i32, %c0_i32_0 : i32, i32
  }
  func.func @transform_13(%arg0: i32) -> (i32, i32, i32) {
    %c0_i32 = arith.constant 0 : i32
    %c0_i32_0 = arith.constant 0 : i32
    %c0_i32_1 = arith.constant 0 : i32
    return %arg0, %c0_i32, %c0_i32_0 : i32, i32, i32
  }
}

</mosaic_0001>

<llo_original>
// kernel: _proposal_network_core.1
$region0: #{_proposal_network_core.1}
  #allocation0 [shape = 'u32[]', space=smem, size = 0x4, offset = 0x4, fixed_abs, tag = 'smem constant byte address 0x4 - core index']
  #allocation1 [shape = 'u32[72,128]{1,0:T(1,128)}', space=vmem, size = 0x9000, scoped, tag = 'internal scratch']
  #allocation2 [shape = 'bf16[32,384]{1,0:T(8,128)(2,1)}', space=vmem, size = 0x6000, scoped, tag = 'scratch operand']
  #allocation3 [shape = 'bf16[32,384]{1,0:T(8,128)(2,1)}', space=vmem, size = 0x6000, scoped, tag = 'scratch operand']
  %s0 = inlined_call_operand.vmem [shape: f32[1,384], index: 0, kind: input, shape index: {}]
  %s1 = inlined_call_operand.vmem [shape: f32[1,288], index: 1, kind: input, shape index: {}]
  %s2 = inlined_call_operand.vmem [shape: f32[2,8,384], index: 2, kind: input, shape index: {}]
  %s3 = inlined_call_operand.vmem [shape: f32[8,1], index: 3, kind: input, shape index: {}]
  %s4 = inlined_call_operand.vmem [shape: f32[8,1], index: 4, kind: input, shape index: {}]
  %s5 = inlined_call_operand.vmem [shape: f32[32,72], index: 5, kind: input, shape index: {}]
  %s6 = inlined_call_operand.vmem [shape: f32[32,1], index: 6, kind: input, shape index: {}]
  %s7 = inlined_call_operand.vmem [shape: bf16[32,288], index: 7, kind: input, shape index: {}]
  %s8 = inlined_call_operand.vmem [shape: f32[32,1], index: 8, kind: input, shape index: {}]
  %s9 = inlined_call_operand.vmem [shape: bf16[32,288], index: 9, kind: input, shape index: {}]
  %s10 = inlined_call_operand.vmem [shape: f32[32,1], index: 10, kind: input, shape index: {}]
  %s11 = inlined_call_operand.vmem [shape: bf16[16,32], index: 11, kind: input, shape index: {}]
  %s12 = inlined_call_operand.vmem [shape: f32[16,1], index: 12, kind: input, shape index: {}]
  %s13 = inlined_call_operand.vmem [shape: f32[2,16,288], index: 13, kind: output, shape index: {}]
  %s14 = sld [smem:[#allocation0]]
  $region85: #{_proposal_network_core.1} parent=0
    _
  %s16 = ssub.s32 1, %s14
  %s17 = scalar_select 0, %s16, %s14
  loop: start=0, step=1, limit=4
  $region2: #{_proposal_network_core.1} parent=0 // loop_pre_header
    _
  $region3: #{_proposal_network_core.1} parent=0 // loop_header
    %s19 = sphi 0, %s23
    %p20 = scmp.ge.s32.totalorder %s19, 4
    %s27 = sphi 0, %s27
    %s29 = sphi 0, %s27
    %s30 = sphi 0, %s29
    %s44 = sphi 0, %s30
    %s48 = sphi 0, %s48
    %s50 = sphi 0, %s48
    %s51 = sphi 0, %s50
    %s65 = sphi 0, %s51
    %s71 = sphi 0, %s73
    %s74 = sphi 0, %s71
    %s75 = sphi 0, %s74
    %s91 = sphi 0, %s75
    %s95 = sphi 0, %s95
    %s97 = sphi 0, %s95
    %s98 = sphi 0, %s97
    %s112 = sphi 0, %s98
    %s116 = sphi 0, %s116
    %s118 = sphi 0, %s116
    %s119 = sphi 0, %s118
    %s133 = sphi 0, %s119
    %s137 = sphi 0, %s137
    %s139 = sphi 0, %s137
    %s140 = sphi 0, %s139
    %s154 = sphi 0, %s140
    %s158 = sphi 0, %s158
    %s160 = sphi 0, %s158
    %s161 = sphi 0, %s160
    %s175 = sphi 0, %s161
    %s179 = sphi 0, %s179
    %s181 = sphi 0, %s179
    %s182 = sphi 0, %s181
    %s196 = sphi 0, %s182
    %s200 = sphi 0, %s200
    %s202 = sphi 0, %s200
    %s203 = sphi 0, %s202
    %s217 = sphi 0, %s203
    %s221 = sphi 0, %s221
    %s223 = sphi 0, %s221
    %s224 = sphi 0, %s223
    %s238 = sphi 0, %s224
    %s242 = sphi 0, %s242
    %s244 = sphi 0, %s242
    %s245 = sphi 0, %s244
    %s259 = sphi 0, %s245
    %s263 = sphi 0, %s263
    %s265 = sphi 0, %s263
    %s266 = sphi 0, %s265
    %s280 = sphi 0, %s266
    %s284 = sphi 0, %s284
    %s286 = sphi 0, %s284
    %s287 = sphi 0, %s286
    %s301 = sphi 0, %s287
    %s307 = sphi 0, %s309
    %s310 = sphi 0, %s307
    %s311 = sphi 0, %s310
    %s327 = sphi 0, %s311
  $region4: #{_proposal_network_core.1} parent=0 // loop_header_branch
    %22 = sbr.rel (%p20) target = $region8
  $region5: #{_proposal_network_core.1} parent=0 // loop_body
    %s24 = ssub.s32 %s19, 1
    %s25 = ssub.s32 %s19, 2
    %s26 = sadd.s32 %s19, 1
    %s28 = sadd.s32 %s27, 1
    %p31 = scmp.eq.s32.totalorder %s19, 1
    %p32 = scmp.ne.s32.totalorder %s27, %s29
    %p33 = scmp.eq.s32.totalorder %s19, 0
    %p34 = por %p32, %p33
    %p35 = scmp.ne.s32.totalorder %s27, %s29
    %p36 = scmp.eq.s32.totalorder %s24, 1
    %p37 = por %p35, %p36
    %p38 = scmp.ne.s32.totalorder %s29, %s30
    %p39 = scmp.eq.s32.totalorder %s24, 0
    %p40 = por %p38, %p39
    %p41 = scmp.ne.s32.totalorder %s29, %s30
    %p42 = scmp.eq.s32.totalorder %s25, 1
    %p43 = por %p41, %p42
    %p45 = scmp.ne.s32.totalorder %s30, %s44
    %p46 = scmp.eq.s32.totalorder %s25, 0
    %p47 = por %p45, %p46
    %s49 = sadd.s32 %s48, 1
    %p52 = scmp.eq.s32.totalorder %s19, 1
    %p53 = scmp.ne.s32.totalorder %s48, %s50
    %p54 = scmp.eq.s32.totalorder %s19, 0
    %p55 = por %p53, %p54
    %p56 = scmp.ne.s32.totalorder %s48, %s50
    %p57 = scmp.eq.s32.totalorder %s24, 1
    %p58 = por %p56, %p57
    %p59 = scmp.ne.s32.totalorder %s50, %s51
    %p60 = scmp.eq.s32.totalorder %s24, 0
    %p61 = por %p59, %p60
    %p62 = scmp.ne.s32.totalorder %s50, %s51
    %p63 = scmp.eq.s32.totalorder %s25, 1
    %p64 = por %p62, %p63
    %p66 = scmp.ne.s32.totalorder %s51, %s65
    %p67 = scmp.eq.s32.totalorder %s25, 0
    %p68 = por %p66, %p67
    %s69 = ssub.s32 %s19, %s26
    %p70 = scmp.eq.s32.totalorder %s69, 0
    %s72 = sadd.s32 %s71, 1
    %s73 = scalar_select %p70, %s71, %s72
    %p76 = pneg %p70
    %p77 = scmp.eq.s32.totalorder %s19, 1
    %p78 = por %p76, %p77
    %p79 = scmp.ne.s32.totalorder %s71, %s74
    %p80 = scmp.eq.s32.totalorder %s19, 0
    %p81 = por %p79, %p80
    %p82 = scmp.ne.s32.totalorder %s71, %s74
    %p83 = scmp.eq.s32.totalorder %s24, 1
    %p84 = por %p82, %p83
    %p85 = scmp.ne.s32.totalorder %s74, %s75
    %p86 = scmp.eq.s32.totalorder %s24, 0
    %p87 = por %p85, %p86
    %p88 = scmp.ne.s32.totalorder %s74, %s75
    %p89 = scmp.eq.s32.totalorder %s25, 1
    %p90 = por %p88, %p89
    %p92 = scmp.ne.s32.totalorder %s75, %s91
    %p93 = scmp.eq.s32.totalorder %s25, 0
    %p94 = por %p92, %p93
    %s96 = sadd.s32 %s95, 1
    %p99 = scmp.eq.s32.totalorder %s19, 1
    %p100 = scmp.ne.s32.totalorder %s95, %s97
    %p101 = scmp.eq.s32.totalorder %s19, 0
    %p102 = por %p100, %p101
    %p103 = scmp.ne.s32.totalorder %s95, %s97
    %p104 = scmp.eq.s32.totalorder %s24, 1
    %p105 = por %p103, %p104
    %p106 = scmp.ne.s32.totalorder %s97, %s98
    %p107 = scmp.eq.s32.totalorder %s24, 0
    %p108 = por %p106, %p107
    %p109 = scmp.ne.s32.totalorder %s97, %s98
    %p110 = scmp.eq.s32.totalorder %s25, 1
    %p111 = por %p109, %p110
    %p113 = scmp.ne.s32.totalorder %s98, %s112
    %p114 = scmp.eq.s32.totalorder %s25, 0
    %p115 = por %p113, %p114
    %s117 = sadd.s32 %s116, 1
    %p120 = scmp.eq.s32.totalorder %s19, 1
    %p121 = scmp.ne.s32.totalorder %s116, %s118
    %p122 = scmp.eq.s32.totalorder %s19, 0
    %p123 = por %p121, %p122
    %p124 = scmp.ne.s32.totalorder %s116, %s118
    %p125 = scmp.eq.s32.totalorder %s24, 1
    %p126 = por %p124, %p125
    %p127 = scmp.ne.s32.totalorder %s118, %s119
    %p128 = scmp.eq.s32.totalorder %s24, 0
    %p129 = por %p127, %p128
    %p130 = scmp.ne.s32.totalorder %s118, %s119
    %p131 = scmp.eq.s32.totalorder %s25, 1
    %p132 = por %p130, %p131
    %p134 = scmp.ne.s32.totalorder %s119, %s133
    %p135 = scmp.eq.s32.totalorder %s25, 0
    %p136 = por %p134, %p135
    %s138 = sadd.s32 %s137, 1
    %p141 = scmp.eq.s32.totalorder %s19, 1
    %p142 = scmp.ne.s32.totalorder %s137, %s139
    %p143 = scmp.eq.s32.totalorder %s19, 0
    %p144 = por %p142, %p143
    %p145 = scmp.ne.s32.totalorder %s137, %s139
    %p146 = scmp.eq.s32.totalorder %s24, 1
    %p147 = por %p145, %p146
    %p148 = scmp.ne.s32.totalorder %s139, %s140
    %p149 = scmp.eq.s32.totalorder %s24, 0
    %p150 = por %p148, %p149
    %p151 = scmp.ne.s32.totalorder %s139, %s140
    %p152 = scmp.eq.s32.totalorder %s25, 1
    %p153 = por %p151, %p152
    %p155 = scmp.ne.s32.totalorder %s140, %s154
    %p156 = scmp.eq.s32.totalorder %s25, 0
    %p157 = por %p155, %p156
    %s159 = sadd.s32 %s158, 1
    %p162 = scmp.eq.s32.totalorder %s19, 1
    %p163 = scmp.ne.s32.totalorder %s158, %s160
    %p164 = scmp.eq.s32.totalorder %s19, 0
    %p165 = por %p163, %p164
    %p166 = scmp.ne.s32.totalorder %s158, %s160
    %p167 = scmp.eq.s32.totalorder %s24, 1
    %p168 = por %p166, %p167
    %p169 = scmp.ne.s32.totalorder %s160, %s161
    %p170 = scmp.eq.s32.totalorder %s24, 0
    %p171 = por %p169, %p170
    %p172 = scmp.ne.s32.totalorder %s160, %s161
    %p173 = scmp.eq.s32.totalorder %s25, 1
    %p174 = por %p172, %p173
    %p176 = scmp.ne.s32.totalorder %s161, %s175
    %p177 = scmp.eq.s32.totalorder %s25, 0
    %p178 = por %p176, %p177
    %s180 = sadd.s32 %s179, 1
    %p183 = scmp.eq.s32.totalorder %s19, 1
    %p184 = scmp.ne.s32.totalorder %s179, %s181
    %p185 = scmp.eq.s32.totalorder %s19, 0
    %p186 = por %p184, %p185
    %p187 = scmp.ne.s32.totalorder %s179, %s181
    %p188 = scmp.eq.s32.totalorder %s24, 1
    %p189 = por %p187, %p188
    %p190 = scmp.ne.s32.totalorder %s181, %s182
    %p191 = scmp.eq.s32.totalorder %s24, 0
    %p192 = por %p190, %p191
    %p193 = scmp.ne.s32.totalorder %s181, %s182
    %p194 = scmp.eq.s32.totalorder %s25, 1
    %p195 = por %p193, %p194
    %p197 = scmp.ne.s32.totalorder %s182, %s196
    %p198 = scmp.eq.s32.totalorder %s25, 0
    %p199 = por %p197, %p198
    %s201 = sadd.s32 %s200, 1
    %p204 = scmp.eq.s32.totalorder %s19, 1
    %p205 = scmp.ne.s32.totalorder %s200, %s202
    %p206 = scmp.eq.s32.totalorder %s19, 0
    %p207 = por %p205, %p206
    %p208 = scmp.ne.s32.totalorder %s200, %s202
    %p209 = scmp.eq.s32.totalorder %s24, 1
    %p210 = por %p208, %p209
    %p211 = scmp.ne.s32.totalorder %s202, %s203
    %p212 = scmp.eq.s32.totalorder %s24, 0
    %p213 = por %p211, %p212
    %p214 = scmp.ne.s32.totalorder %s202, %s203
    %p215 = scmp.eq.s32.totalorder %s25, 1
    %p216 = por %p214, %p215
    %p218 = scmp.ne.s32.totalorder %s203, %s217
    %p219 = scmp.eq.s32.totalorder %s25, 0
    %p220 = por %p218, %p219
    %s222 = sadd.s32 %s221, 1
    %p225 = scmp.eq.s32.totalorder %s19, 1
    %p226 = scmp.ne.s32.totalorder %s221, %s223
    %p227 = scmp.eq.s32.totalorder %s19, 0
    %p228 = por %p226, %p227
    %p229 = scmp.ne.s32.totalorder %s221, %s223
    %p230 = scmp.eq.s32.totalorder %s24, 1
    %p231 = por %p229, %p230
    %p232 = scmp.ne.s32.totalorder %s223, %s224
    %p233 = scmp.eq.s32.totalorder %s24, 0
    %p234 = por %p232, %p233
    %p235 = scmp.ne.s32.totalorder %s223, %s224
    %p236 = scmp.eq.s32.totalorder %s25, 1
    %p237 = por %p235, %p236
    %p239 = scmp.ne.s32.totalorder %s224, %s238
    %p240 = scmp.eq.s32.totalorder %s25, 0
    %p241 = por %p239, %p240
    %s243 = sadd.s32 %s242, 1
    %p246 = scmp.eq.s32.totalorder %s19, 1
    %p247 = scmp.ne.s32.totalorder %s242, %s244
    %p248 = scmp.eq.s32.totalorder %s19, 0
    %p249 = por %p247, %p248
    %p250 = scmp.ne.s32.totalorder %s242, %s244
    %p251 = scmp.eq.s32.totalorder %s24, 1
    %p252 = por %p250, %p251
    %p253 = scmp.ne.s32.totalorder %s244, %s245
    %p254 = scmp.eq.s32.totalorder %s24, 0
    %p255 = por %p253, %p254
    %p256 = scmp.ne.s32.totalorder %s244, %s245
    %p257 = scmp.eq.s32.totalorder %s25, 1
    %p258 = por %p256, %p257
    %p260 = scmp.ne.s32.totalorder %s245, %s259
    %p261 = scmp.eq.s32.totalorder %s25, 0
    %p262 = por %p260, %p261
    %s264 = sadd.s32 %s263, 1
    %p267 = scmp.eq.s32.totalorder %s19, 1
    %p268 = scmp.ne.s32.totalorder %s263, %s265
    %p269 = scmp.eq.s32.totalorder %s19, 0
    %p270 = por %p268, %p269
    %p271 = scmp.ne.s32.totalorder %s263, %s265
    %p272 = scmp.eq.s32.totalorder %s24, 1
    %p273 = por %p271, %p272
    %p274 = scmp.ne.s32.totalorder %s265, %s266
    %p275 = scmp.eq.s32.totalorder %s24, 0
    %p276 = por %p274, %p275
    %p277 = scmp.ne.s32.totalorder %s265, %s266
    %p278 = scmp.eq.s32.totalorder %s25, 1
    %p279 = por %p277, %p278
    %p281 = scmp.ne.s32.totalorder %s266, %s280
    %p282 = scmp.eq.s32.totalorder %s25, 0
    %p283 = por %p281, %p282
    %s285 = sadd.s32 %s284, 1
    %p288 = scmp.eq.s32.totalorder %s19, 1
    %p289 = scmp.ne.s32.totalorder %s284, %s286
    %p290 = scmp.eq.s32.totalorder %s19, 0
    %p291 = por %p289, %p290
    %p292 = scmp.ne.s32.totalorder %s284, %s286
    %p293 = scmp.eq.s32.totalorder %s24, 1
    %p294 = por %p292, %p293
    %p295 = scmp.ne.s32.totalorder %s286, %s287
    %p296 = scmp.eq.s32.totalorder %s24, 0
    %p297 = por %p295, %p296
    %p298 = scmp.ne.s32.totalorder %s286, %s287
    %p299 = scmp.eq.s32.totalorder %s25, 1
    %p300 = por %p298, %p299
    %p302 = scmp.ne.s32.totalorder %s287, %s301
    %p303 = scmp.eq.s32.totalorder %s25, 0
    %p304 = por %p302, %p303
    %s305 = ssub.s32 %s19, %s26
    %p306 = scmp.eq.s32.totalorder %s305, 0
    %s308 = sadd.s32 %s307, 1
    %s309 = scalar_select %p306, %s307, %s308
    %p312 = pneg %p306
    %p313 = scmp.eq.s32.totalorder %s19, 1
    %p314 = por %p312, %p313
    %p315 = scmp.ne.s32.totalorder %s307, %s310
    %p316 = scmp.eq.s32.totalorder %s19, 0
    %p317 = por %p315, %p316
    %p318 = scmp.ne.s32.totalorder %s307, %s310
    %p319 = scmp.eq.s32.totalorder %s24, 1
    %p320 = por %p318, %p319
    %p321 = scmp.ne.s32.totalorder %s310, %s311
    %p322 = scmp.eq.s32.totalorder %s24, 0
    %p323 = por %p321, %p322
    %p324 = scmp.ne.s32.totalorder %s310, %s311
    %p325 = scmp.eq.s32.totalorder %s25, 1
    %p326 = por %p324, %p325
    %p328 = scmp.ne.s32.totalorder %s311, %s327
    %p329 = scmp.eq.s32.totalorder %s25, 0
    %p330 = por %p328, %p329
    %p331 = scmp.le.s32.totalorder 1, %s19
    %p332 = scmp.lt.s32.totalorder %s19, 3
    %p333 = pnand %p331, %p332
    %p334 = pneg %p333
    // Predicated region
    $region9: #{_proposal_network_core.1} parent=5 // pred_check
      _
    $region10: #{_proposal_network_core.1} parent=5 // pred_check_branch
      %336 = sbr.rel (%p333) target = $region12
    $region11: #{_proposal_network_core.1} parent=5 // pred_region
      %s337 = ssub.s32 %s19, 1
      // Predicated region
      $region13: #{_proposal_network_core.1} parent=11 // pred_check
        %p338 = pneg %p40
      $region14: #{_proposal_network_core.1} parent=11 // pred_check_branch
        %340 = sbr.rel (%p338) target = $region16
      $region15: #{_proposal_network_core.1} parent=11 // pred_region
        _
      $region16: #{_proposal_network_core.1} parent=11 // pred_fallthru
        _
      // Predicated region
      $region17: #{_proposal_network_core.1} parent=11 // pred_check
        %p341 = pneg %p61
      $region18: #{_proposal_network_core.1} parent=11 // pred_check_branch
        %343 = sbr.rel (%p341) target = $region20
      $region19: #{_proposal_network_core.1} parent=11 // pred_region
        _
      $region20: #{_proposal_network_core.1} parent=11 // pred_fallthru
        _
      // Predicated region
      $region21: #{_proposal_network_core.1} parent=11 // pred_check
        %p344 = pneg %p108
      $region22: #{_proposal_network_core.1} parent=11 // pred_check_branch
        %346 = sbr.rel (%p344) target = $region24
      $region23: #{_proposal_network_core.1} parent=11 // pred_region
        _
      $region24: #{_proposal_network_core.1} parent=11 // pred_fallthru
        _
      // Predicated region
      $region25: #{_proposal_network_core.1} parent=11 // pred_check
        %p347 = pneg %p129
      $region26: #{_proposal_network_core.1} parent=11 // pred_check_branch
        %349 = sbr.rel (%p347) target = $region28
      $region27: #{_proposal_network_core.1} parent=11 // pred_region
        _
      $region28: #{_proposal_network_core.1} parent=11 // pred_fallthru
        _
      // Predicated region
      $region29: #{_proposal_network_core.1} parent=11 // pred_check
        %p350 = pneg %p150
      $region30: #{_proposal_network_core.1} parent=11 // pred_check_branch
        %352 = sbr.rel (%p350) target = $region32
      $region31: #{_proposal_network_core.1} parent=11 // pred_region
        _
      $region32: #{_proposal_network_core.1} parent=11 // pred_fallthru
        _
      // Predicated region
      $region33: #{_proposal_network_core.1} parent=11 // pred_check
        %p353 = pneg %p171
      $region34: #{_proposal_network_core.1} parent=11 // pred_check_branch
        %355 = sbr.rel (%p353) target = $region36
      $region35: #{_proposal_network_core.1} parent=11 // pred_region
        _
      $region36: #{_proposal_network_core.1} parent=11 // pred_fallthru
        _
      // Predicated region
      $region37: #{_proposal_network_core.1} parent=11 // pred_check
        %p356 = pneg %p192
      $region38: #{_proposal_network_core.1} parent=11 // pred_check_branch
        %358 = sbr.rel (%p356) target = $region40
      $region39: #{_proposal_network_core.1} parent=11 // pred_region
        _
      $region40: #{_proposal_network_core.1} parent=11 // pred_fallthru
        _
      // Predicated region
      $region41: #{_proposal_network_core.1} parent=11 // pred_check
        %p359 = pneg %p213
      $region42: #{_proposal_network_core.1} parent=11 // pred_check_branch
        %361 = sbr.rel (%p359) target = $region44
      $region43: #{_proposal_network_core.1} parent=11 // pred_region
        _
      $region44: #{_proposal_network_core.1} parent=11 // pred_fallthru
        _
      // Predicated region
      $region45: #{_proposal_network_core.1} parent=11 // pred_check
        %p362 = pneg %p234
      $region46: #{_proposal_network_core.1} parent=11 // pred_check_branch
        %364 = sbr.rel (%p362) target = $region48
      $region47: #{_proposal_network_core.1} parent=11 // pred_region
        _
      $region48: #{_proposal_network_core.1} parent=11 // pred_fallthru
        _
      // Predicated region
      $region49: #{_proposal_network_core.1} parent=11 // pred_check
        %p365 = pneg %p255
      $region50: #{_proposal_network_core.1} parent=11 // pred_check_branch
        %367 = sbr.rel (%p365) target = $region52
      $region51: #{_proposal_network_core.1} parent=11 // pred_region
        _
      $region52: #{_proposal_network_core.1} parent=11 // pred_fallthru
        _
      // Predicated region
      $region53: #{_proposal_network_core.1} parent=11 // pred_check
        %p368 = pneg %p276
      $region54: #{_proposal_network_core.1} parent=11 // pred_check_branch
        %370 = sbr.rel (%p368) target = $region56
      $region55: #{_proposal_network_core.1} parent=11 // pred_region
        _
      $region56: #{_proposal_network_core.1} parent=11 // pred_fallthru
        _
      // Predicated region
      $region57: #{_proposal_network_core.1} parent=11 // pred_check
        %p371 = pneg %p297
      $region58: #{_proposal_network_core.1} parent=11 // pred_check_branch
        %373 = sbr.rel (%p371) target = $region60
      $region59: #{_proposal_network_core.1} parent=11 // pred_region
        _
      $region60: #{_proposal_network_core.1} parent=11 // pred_fallthru
        _
    $region12: #{_proposal_network_core.1} parent=5 // pred_fallthru
      _
    %p374 = scmp.lt.s32.totalorder %s19, 2
    // Predicated region
    $region61: #{_proposal_network_core.1} parent=5 // pred_check
      %p375 = pneg %p374
    $region62: #{_proposal_network_core.1} parent=5 // pred_check_branch
      %377 = sbr.rel (%p375) target = $region64
    $region63: #{_proposal_network_core.1} parent=5 // pred_region
      // Predicated region
      $region65: #{_proposal_network_core.1} parent=63 // pred_check
        %p378 = pneg %p81
      $region66: #{_proposal_network_core.1} parent=63 // pred_check_branch
        %380 = sbr.rel (%p378) target = $region68
      $region67: #{_proposal_network_core.1} parent=63 // pred_region
        %p381 = scmp.lt.s32.totalorder %s19, 1
        %s382 = scalar_select %p381, %s19, 1
        %s383 = smul.addr %s382, 3
        %s384 = smul.addr %s383, 8
        %s385 = scalar_lea.vmem %s2, %s384
      $region68: #{_proposal_network_core.1} parent=63 // pred_fallthru
        _
    $region64: #{_proposal_network_core.1} parent=5 // pred_fallthru
      _
    %p386 = scmp.le.s32.totalorder 1, %s19
    %p387 = scmp.lt.s32.totalorder %s19, 3
    %p388 = pnand %p386, %p387
    %p389 = pneg %p388
    // Predicated region
    $region69: #{_proposal_network_core.1} parent=5 // pred_check
      _
    $region70: #{_proposal_network_core.1} parent=5 // pred_check_branch
      %391 = sbr.rel (%p388) target = $region72
    $region71: #{_proposal_network_core.1} parent=5 // pred_region
      %s392 = ssub.s32 %s19, 1
      %p393 = pneg %p40
      %p394 = pneg %p37
      %p395 = pneg %p61
      %p396 = pneg %p58
      %p397 = scmp.lt.s32.totalorder %s24, 1
      %s398 = scalar_select %p397, %s24, 1
      %s399 = smul.addr %s398, 3
      %s400 = smul.addr %s399, 8
      %s401 = scalar_lea.vmem %s2, %s400
      %p402 = pneg %p87
      %p403 = pneg %p84
      %p404 = pneg %p108
      %p405 = pneg %p105
      %p406 = pneg %p129
      %p407 = pneg %p126
      %p408 = pneg %p150
      %p409 = pneg %p147
      %p410 = pneg %p171
      %p411 = pneg %p168
      %p412 = pneg %p192
      %p413 = pneg %p189
      %p414 = pneg %p213
      %p415 = pneg %p210
      %p416 = pneg %p234
      %p417 = pneg %p231
      %p418 = pneg %p255
      %p419 = pneg %p252
      %p420 = pneg %p276
      %p421 = pneg %p273
      %p422 = pneg %p297
      %p423 = pneg %p294
      %p424 = pneg %p323
      %p425 = pneg %p320
      %p426 = scmp.lt.s32.totalorder %s24, 1
      %s427 = scalar_select %p426, %s24, 1
      %s428 = smul.addr %s427, 6
      %s429 = smul.addr %s428, 8
      %s430 = scalar_lea.vmem %s13, %s429
      %p431 = scmp.lt.s32.totalorder %s24, 1
      %s432 = scalar_select %p431, %s24, 1
      %s433 = smul.addr %s432, 3
      %s434 = smul.addr %s433, 8
      %s435 = scalar_lea.vmem %s2, %s434
      %p436 = scmp.lt.s32.totalorder %s24, 1
      %s437 = scalar_select %p436, %s24, 1
      %s438 = smul.addr %s437, 6
      %s439 = smul.addr %s438, 8
      %s440 = scalar_lea.vmem %s13, %s439
      %v442 = vld [vmem:[%s1] sm:$0x7]
      %v443 = vld [vmem:[%s435] sm:$0xff]
      %v444 = vld [vmem:[%s435 + $0x8] sm:$0xff]
      %v445 = vld [vmem:[%s435 + $0x10] sm:$0xff]
      %v446 = vld [vmem:[%s3] sm:$0xff]
      %448 = vset.pattern.permute.xlu0 0
      %449 = vperm.xlu0 %448, %v446
      %v450 = vpop.permute.xlu0 %449
      %v452 = vsub.f32 %v443, %v450
      %v453 = vsub.f32 %v444, %v450
      %v454 = vsub.f32 %v445, %v450
      %v455 = vld [vmem:[%s4] sm:$0xff]
      %457 = vset.pattern.permute.xlu0 0
      %458 = vperm.xlu0 %457, %v455
      %v459 = vpop.permute.xlu0 %458
      %v461 = vmul.f32 %v452, %v459
      %v462 = vmul.f32 %v453, %v459
      %v463 = vmul.f32 %v454, %v459
      %v464 = vld [vmem:[%s0] sm:$0x7]
      %v466 = vperm.slane %v464, 0
      %v467 = vperm.slane %v464, 1
      %v468 = vperm.slane %v464, 2
      %v472 = vmul.f32 %v461, %v466
      %v473 = vmul.f32 %v462, %v467
      %v474 = vmul.f32 %v463, %v468
      %478 = vrot.lane.b32.xlu0 %v472, 127
      %v479 = vpop.permute.xlu0 %478
      %480 = vrot.lane.b32.xlu0 %v473, 127
      %v481 = vpop.permute.xlu0 %480
      %482 = vrot.lane.b32.xlu0 %v474, 127
      %v483 = vpop.permute.xlu0 %482
      %vm484 = vcmask 1039360
      %v485 = vsel %vm484, %v479, %v481
      %v486 = vsel %vm484, %v481, %v483
      %490 = vrot.lane.b32.xlu0 %v472, 126
      %v491 = vpop.permute.xlu0 %490
      %492 = vrot.lane.b32.xlu0 %v473, 126
      %v493 = vpop.permute.xlu0 %492
      %494 = vrot.lane.b32.xlu0 %v474, 126
      %v495 = vpop.permute.xlu0 %494
      %vm496 = vcmask 1031168
      %v497 = vsel %vm496, %v491, %v493
      %v498 = vsel %vm496, %v493, %v495
      %502 = vrot.lane.b32.xlu0 %v472, 110
      %v503 = vpop.permute.xlu0 %502
      %504 = vrot.lane.b32.xlu0 %v473, 110
      %v505 = vpop.permute.xlu0 %504
      %506 = vrot.lane.b32.xlu0 %v474, 110
      %v507 = vpop.permute.xlu0 %506
      %vm508 = vcmask 900096
      %v509 = vsel %vm508, %v503, %v505
      %v510 = vsel %vm508, %v505, %v507
      %514 = vrot.lane.b32.xlu0 %v472, 109
      %v515 = vpop.permute.xlu0 %514
      %516 = vrot.lane.b32.xlu0 %v473, 109
      %v517 = vpop.permute.xlu0 %516
      %518 = vrot.lane.b32.xlu0 %v474, 109
      %v519 = vpop.permute.xlu0 %518
      %vm520 = vcmask 891904
      %v521 = vsel %vm520, %v515, %v517
      %v522 = vsel %vm520, %v517, %v519
      %526 = vrot.lane.b32.xlu0 %v472, 108
      %v527 = vpop.permute.xlu0 %526
      %528 = vrot.lane.b32.xlu0 %v473, 108
      %v529 = vpop.permute.xlu0 %528
      %530 = vrot.lane.b32.xlu0 %v474, 108
      %v531 = vpop.permute.xlu0 %530
      %vm532 = vcmask 883712
      %v533 = vsel %vm532, %v527, %v529
      %v534 = vsel %vm532, %v529, %v531
      %538 = vrot.lane.b32.xlu0 %v472, 92
      %v539 = vpop.permute.xlu0 %538
      %540 = vrot.lane.b32.xlu0 %v473, 92
      %v541 = vpop.permute.xlu0 %540
      %542 = vrot.lane.b32.xlu0 %v474, 92
      %v543 = vpop.permute.xlu0 %542
      %vm544 = vcmask 752640
      %v545 = vsel %vm544, %v539, %v541
      %v546 = vsel %vm544, %v541, %v543
      %550 = vrot.lane.b32.xlu0 %v472, 91
      %v551 = vpop.permute.xlu0 %550
      %552 = vrot.lane.b32.xlu0 %v473, 91
      %v553 = vpop.permute.xlu0 %552
      %554 = vrot.lane.b32.xlu0 %v474, 91
      %v555 = vpop.permute.xlu0 %554
      %vm556 = vcmask 744448
      %v557 = vsel %vm556, %v551, %v553
      %v558 = vsel %vm556, %v553, %v555
      %562 = vrot.lane.b32.xlu0 %v472, 90
      %v563 = vpop.permute.xlu0 %562
      %564 = vrot.lane.b32.xlu0 %v473, 90
      %v565 = vpop.permute.xlu0 %564
      %566 = vrot.lane.b32.xlu0 %v474, 90
      %v567 = vpop.permute.xlu0 %566
      %vm568 = vcmask 736256
      %v569 = vsel %vm568, %v563, %v565
      %v570 = vsel %vm568, %v565, %v567
      %v574 = vld [vmem:[%s5] sm:$0xff]
      %v575 = vld [vmem:[%s5 + $0x8] sm:$0xff]
      %v576 = vld [vmem:[%s5 + $0x10] sm:$0xff]
      %v577 = vld [vmem:[%s5 + $0x18] sm:$0xff]
      %v578 = vld [vmem:[%s6] sm:$0xff]
      %v579 = vld [vmem:[%s6 + $0x8] sm:$0xff]
      %v580 = vld [vmem:[%s6 + $0x10] sm:$0xff]
      %v581 = vld [vmem:[%s6 + $0x18] sm:$0xff]
      %583 = vset.pattern.permute.xlu0 0
      %584 = vperm.xlu0 %583, %v578
      %v585 = vpop.permute.xlu0 %584
      %588 = vset.pattern.permute.xlu0 0
      %589 = vperm.xlu0 %588, %v579
      %v590 = vpop.permute.xlu0 %589
      %593 = vset.pattern.permute.xlu0 0
      %594 = vperm.xlu0 %593, %v580
      %v595 = vpop.permute.xlu0 %594
      %598 = vset.pattern.permute.xlu0 0
      %599 = vperm.xlu0 %598, %v581
      %v600 = vpop.permute.xlu0 %599
      %vm602 = vcmask 588800
      %v604 = vsel %vm602, %v574, 0
      %v607 = vsel %vm602, %v575, 0
      %v610 = vsel %vm602, %v576, 0
      %v613 = vsel %vm602, %v577, 0
      %615 = vmatpush.msra.mxu0 0.0
      %616 = vmatpush.msra.mxu0 0.0
      %617 = vmatpush.msra.mxu0 0.0
      %618 = vmatpush.msra.mxu0 0.0
      %619 = vmatpush.msra.mxu0 0.0
      %620 = vmatpush.msra.mxu0 0.0
      %621 = vmatpush.msra.mxu0 0.0
      %622 = vmatpush.msra.mxu0 %v569
      %623 = vmatpush.msra.mxu0 %v557
      %624 = vmatpush.msra.mxu0 %v545
      %625 = vmatpush.msra.mxu0 %v533
      %626 = vmatpush.msra.mxu0 %v521
      %627 = vmatpush.msra.mxu0 %v509
      %628 = vmatpush.msra.mxu0 %v497
      %629 = vmatpush.msra.mxu0 %v485
      %630 = vmatpush.msra.mxu0 %v472
      %631 = vmatmul.f32.gmra.mxu0 %v604
      %v632 = vpop.f32.mrf.mxu0
      %v633 = vadd.f32 %v585, %v632
      %634 = vmatmul.f32.gmra.mxu0 %v607
      %v635 = vpop.f32.mrf.mxu0
      %v636 = vadd.f32 %v590, %v635
      %637 = vmatmul.f32.gmra.mxu0 %v610
      %v638 = vpop.f32.mrf.mxu0
      %v639 = vadd.f32 %v595, %v638
      %640 = vmatmul.f32.gmra.mxu0 %v613
      %v641 = vpop.f32.mrf.mxu0
      %v642 = vadd.f32 %v600, %v641
      %643 = vdwg.mxu0
      %644 = vmatpush.msra.mxu0 0.0
      %645 = vmatpush.msra.mxu0 0.0
      %646 = vmatpush.msra.mxu0 0.0
      %647 = vmatpush.msra.mxu0 0.0
      %648 = vmatpush.msra.mxu0 0.0
      %649 = vmatpush.msra.mxu0 0.0
      %650 = vmatpush.msra.mxu0 0.0
      %651 = vmatpush.msra.mxu0 %v570
      %652 = vmatpush.msra.mxu0 %v558
      %653 = vmatpush.msra.mxu0 %v546
      %654 = vmatpush.msra.mxu0 %v534
      %655 = vmatpush.msra.mxu0 %v522
      %656 = vmatpush.msra.mxu0 %v510
      %657 = vmatpush.msra.mxu0 %v498
      %658 = vmatpush.msra.mxu0 %v486
      %659 = vmatpush.msra.mxu0 %v473
      %660 = vmatmul.f32.gmra.mxu0 %v604
      %v661 = vpop.f32.mrf.mxu0
      %v662 = vadd.f32 %v585, %v661
      %663 = vmatmul.f32.gmra.mxu0 %v607
      %v664 = vpop.f32.mrf.mxu0
      %v665 = vadd.f32 %v590, %v664
      %666 = vmatmul.f32.gmra.mxu0 %v610
      %v667 = vpop.f32.mrf.mxu0
      %v668 = vadd.f32 %v595, %v667
      %669 = vmatmul.f32.gmra.mxu0 %v613
      %v670 = vpop.f32.mrf.mxu0
      %v671 = vadd.f32 %v600, %v670
      %672 = vdwg.mxu0
      %673 = vmatpush.msra.mxu0 0.0
      %674 = vmatpush.msra.mxu0 0.0
      %675 = vmatpush.msra.mxu0 0.0
      %676 = vmatpush.msra.mxu0 0.0
      %677 = vmatpush.msra.mxu0 0.0
      %678 = vmatpush.msra.mxu0 0.0
      %679 = vmatpush.msra.mxu0 0.0
      %680 = vmatpush.msra.mxu0 %v567
      %681 = vmatpush.msra.mxu0 %v555
      %682 = vmatpush.msra.mxu0 %v543
      %683 = vmatpush.msra.mxu0 %v531
      %684 = vmatpush.msra.mxu0 %v519
      %685 = vmatpush.msra.mxu0 %v507
      %686 = vmatpush.msra.mxu0 %v495
      %687 = vmatpush.msra.mxu0 %v483
      %688 = vmatpush.msra.mxu0 %v474
      %689 = vmatmul.f32.gmra.mxu0 %v604
      %v690 = vpop.f32.mrf.mxu0
      %v691 = vadd.f32 %v585, %v690
      %692 = vmatmul.f32.gmra.mxu0 %v607
      %v693 = vpop.f32.mrf.mxu0
      %v694 = vadd.f32 %v590, %v693
      %695 = vmatmul.f32.gmra.mxu0 %v610
      %v696 = vpop.f32.mrf.mxu0
      %v697 = vadd.f32 %v595, %v696
      %698 = vmatmul.f32.gmra.mxu0 %v613
      %v699 = vpop.f32.mrf.mxu0
      %v700 = vadd.f32 %v600, %v699
      %701 = vdwg.mxu0
      %v702 = vmax.f32 %v633, 0.0
      %v703 = vmax.f32 %v662, 0.0
      %v704 = vmax.f32 %v691, 0.0
      %v705 = vmax.f32 %v636, 0.0
      %v706 = vmax.f32 %v665, 0.0
      %v707 = vmax.f32 %v694, 0.0
      %v708 = vmax.f32 %v639, 0.0
      %v709 = vmax.f32 %v668, 0.0
      %v710 = vmax.f32 %v697, 0.0
      %v711 = vmax.f32 %v642, 0.0
      %v712 = vmax.f32 %v671, 0.0
      %v713 = vmax.f32 %v700, 0.0
      %v715 = vperm.slane %v442, 0
      %v716 = vperm.slane %v442, 1
      %v717 = vperm.slane %v442, 2
      %v721 = vmul.f32 %v702, %v715
      %v722 = vmul.f32 %v703, %v716
      %v723 = vmul.f32 %v704, %v717
      %v724 = vmul.f32 %v705, %v715
      %v725 = vmul.f32 %v706, %v716
      %v726 = vmul.f32 %v707, %v717
      %v727 = vmul.f32 %v708, %v715
      %v728 = vmul.f32 %v709, %v716
      %v729 = vmul.f32 %v710, %v717
      %v730 = vmul.f32 %v711, %v715
      %v731 = vmul.f32 %v712, %v716
      %v732 = vmul.f32 %v713, %v717
      %vm733 = vcmask 150528
      %734 = vst.msk [vmem:[#allocation2] sm:$0xf] %vm733, 0
      %735 = vst.msk [vmem:[#allocation2 + $0xc] sm:$0xf] %vm733, 0
      %736 = vst.msk [vmem:[#allocation2 + $0x18] sm:$0xf] %vm733, 0
      %737 = vst.msk [vmem:[#allocation2 + $0x24] sm:$0xf] %vm733, 0
      %v738 = vpack.c.bf16 %v722, %v721
      %v739 = vpack.c.bf16 %v723, %v723
      %v740 = vpack.c.bf16 %v725, %v724
      %v741 = vpack.c.bf16 %v726, %v726
      %v742 = vpack.c.bf16 %v728, %v727
      %v743 = vpack.c.bf16 %v729, %v729
      %v744 = vpack.c.bf16 %v731, %v730
      %v745 = vpack.c.bf16 %v732, %v732
      %754 = vrot.lane.b32.xlu0 %v738, 19
      %v755 = vpop.permute.xlu0 %754
      %756 = vrot.lane.b32.xlu0 %v739, 19
      %v757 = vpop.permute.xlu0 %756
      %758 = vrot.lane.b32.xlu0 %v740, 19
      %v759 = vpop.permute.xlu0 %758
      %760 = vrot.lane.b32.xlu0 %v741, 19
      %v761 = vpop.permute.xlu0 %760
      %762 = vrot.lane.b32.xlu0 %v742, 19
      %v763 = vpop.permute.xlu0 %762
      %764 = vrot.lane.b32.xlu0 %v743, 19
      %v765 = vpop.permute.xlu0 %764
      %766 = vrot.lane.b32.xlu0 %v744, 19
      %v767 = vpop.permute.xlu0 %766
      %768 = vrot.lane.b32.xlu0 %v745, 19
      %v769 = vpop.permute.xlu0 %768
      %v770 = vrot.slane %v755, 4
      %v771 = vrot.slane %v759, 4
      %v772 = vrot.slane %v763, 4
      %v773 = vrot.slane %v767, 4
      %vm774 = vcmask 154624
      %v775 = vsel %vm774, %v770, %v755
      %v776 = vsel %vm774, %v770, %v757
      %v777 = vsel %vm774, %v771, %v759
      %v778 = vsel %vm774, %v771, %v761
      %v779 = vsel %vm774, %v772, %v763
      %v780 = vsel %vm774, %v772, %v765
      %v781 = vsel %vm774, %v773, %v767
      %v782 = vsel %vm774, %v773, %v769
      %vm791 = vcmask 1043608
      %vm792 = vcmask 1047556
      %vm793 = vmor %vm792, %vm791
      %794 = vst.msk [vmem:[#allocation2] sm:$0xff] %vm793, %v775
      %vm795 = vcmask 412672
      %796 = vst.msk [vmem:[#allocation2 + $0x8] sm:$0xf] %vm795, %v776
      %797 = vst.msk [vmem:[#allocation2 + $0xc] sm:$0xff] %vm793, %v777
      %798 = vst.msk [vmem:[#allocation2 + $0x14] sm:$0xf] %vm795, %v778
      %799 = vst.msk [vmem:[#allocation2 + $0x18] sm:$0xff] %vm793, %v779
      %800 = vst.msk [vmem:[#allocation2 + $0x20] sm:$0xf] %vm795, %v780
      %801 = vst.msk [vmem:[#allocation2 + $0x24] sm:$0xff] %vm793, %v781
      %802 = vst.msk [vmem:[#allocation2 + $0x2c] sm:$0xf] %vm795, %v782
      %vm803 = vcmask 1043864
      %804 = vst.msk [vmem:[#allocation2 + $0x8] sm:$0xf] %vm803, 0
      %805 = vst.msk [vmem:[#allocation2 + $0x14] sm:$0xf] %vm803, 0
      %806 = vst.msk [vmem:[#allocation2 + $0x20] sm:$0xf] %vm803, 0
      %807 = vst.msk [vmem:[#allocation2 + $0x2c] sm:$0xf] %vm803, 0
      %v808 = vld [vmem:[#allocation2] sm:$0xff]
      %v809 = vld [vmem:[#allocation2 + $0x8] sm:$0xf]
      %v810 = vld [vmem:[#allocation2 + $0xc] sm:$0xff]
      %v811 = vld [vmem:[#allocation2 + $0x14] sm:$0xf]
      %v812 = vld [vmem:[#allocation2 + $0x18] sm:$0xff]
      %v813 = vld [vmem:[#allocation2 + $0x20] sm:$0xf]
      %v814 = vld [vmem:[#allocation2 + $0x24] sm:$0xff]
      %v815 = vld [vmem:[#allocation2 + $0x2c] sm:$0xf]
      %v824 = vunpack.c.l.b16 %v808
      %v825 = vunpack.c.h.b16 %v808
      %v826 = vunpack.c.l.b16 %v809
      %v827 = vunpack.c.l.b16 %v810
      %v828 = vunpack.c.h.b16 %v810
      %v829 = vunpack.c.l.b16 %v811
      %v830 = vunpack.c.l.b16 %v812
      %v831 = vunpack.c.h.b16 %v812
      %v832 = vunpack.c.l.b16 %v813
      %v833 = vunpack.c.l.b16 %v814
      %v834 = vunpack.c.h.b16 %v814
      %v835 = vunpack.c.l.b16 %v815
      %v836 = vpack.c.b16 %v827, %v824
      %v837 = vpack.c.b16 %v828, %v825
      %v838 = vpack.c.b16 %v829, %v826
      %v839 = vpack.c.b16 %v833, %v830
      %v840 = vpack.c.b16 %v834, %v831
      %v841 = vpack.c.b16 %v835, %v832
      %848 = vrot.lane.b32.xlu0 %v836, 127
      %v849 = vpop.permute.xlu0 %848
      %850 = vrot.lane.b32.xlu0 %v837, 127
      %v851 = vpop.permute.xlu0 %850
      %852 = vrot.lane.b32.xlu0 %v838, 127
      %v853 = vpop.permute.xlu0 %852
      %854 = vrot.lane.b32.xlu0 %v839, 127
      %v855 = vpop.permute.xlu0 %854
      %856 = vrot.lane.b32.xlu0 %v840, 127
      %v857 = vpop.permute.xlu0 %856
      %858 = vrot.lane.b32.xlu0 %v841, 127
      %v859 = vpop.permute.xlu0 %858
      %vm860 = vcmask 1039360
      %v861 = vsel %vm860, %v849, %v851
      %v862 = vsel %vm860, %v851, %v853
      %v863 = vsel %vm860, %v855, %v857
      %v864 = vsel %vm860, %v857, %v859
      %871 = vrot.lane.b32.xlu0 %v836, 126
      %v872 = vpop.permute.xlu0 %871
      %873 = vrot.lane.b32.xlu0 %v837, 126
      %v874 = vpop.permute.xlu0 %873
      %875 = vrot.lane.b32.xlu0 %v838, 126
      %v876 = vpop.permute.xlu0 %875
      %877 = vrot.lane.b32.xlu0 %v839, 126
      %v878 = vpop.permute.xlu0 %877
      %879 = vrot.lane.b32.xlu0 %v840, 126
      %v880 = vpop.permute.xlu0 %879
      %881 = vrot.lane.b32.xlu0 %v841, 126
      %v882 = vpop.permute.xlu0 %881
      %vm883 = vcmask 1031168
      %v884 = vsel %vm883, %v872, %v874
      %v885 = vsel %vm883, %v874, %v876
      %v886 = vsel %vm883, %v878, %v880
      %v887 = vsel %vm883, %v880, %v882
      %894 = vrot.lane.b32.xlu0 %v836, 110
      %v895 = vpop.permute.xlu0 %894
      %896 = vrot.lane.b32.xlu0 %v837, 110
      %v897 = vpop.permute.xlu0 %896
      %898 = vrot.lane.b32.xlu0 %v838, 110
      %v899 = vpop.permute.xlu0 %898
      %900 = vrot.lane.b32.xlu0 %v839, 110
      %v901 = vpop.permute.xlu0 %900
      %902 = vrot.lane.b32.xlu0 %v840, 110
      %v903 = vpop.permute.xlu0 %902
      %904 = vrot.lane.b32.xlu0 %v841, 110
      %v905 = vpop.permute.xlu0 %904
      %vm906 = vcmask 900096
      %v907 = vsel %vm906, %v895, %v897
      %v908 = vsel %vm906, %v897, %v899
      %v909 = vsel %vm906, %v901, %v903
      %v910 = vsel %vm906, %v903, %v905
      %917 = vrot.lane.b32.xlu0 %v836, 109
      %v918 = vpop.permute.xlu0 %917
      %919 = vrot.lane.b32.xlu0 %v837, 109
      %v920 = vpop.permute.xlu0 %919
      %921 = vrot.lane.b32.xlu0 %v838, 109
      %v922 = vpop.permute.xlu0 %921
      %923 = vrot.lane.b32.xlu0 %v839, 109
      %v924 = vpop.permute.xlu0 %923
      %925 = vrot.lane.b32.xlu0 %v840, 109
      %v926 = vpop.permute.xlu0 %925
      %927 = vrot.lane.b32.xlu0 %v841, 109
      %v928 = vpop.permute.xlu0 %927
      %vm929 = vcmask 891904
      %v930 = vsel %vm929, %v918, %v920
      %v931 = vsel %vm929, %v920, %v922
      %v932 = vsel %vm929, %v924, %v926
      %v933 = vsel %vm929, %v926, %v928
      %940 = vrot.lane.b32.xlu0 %v836, 108
      %v941 = vpop.permute.xlu0 %940
      %942 = vrot.lane.b32.xlu0 %v837, 108
      %v943 = vpop.permute.xlu0 %942
      %944 = vrot.lane.b32.xlu0 %v838, 108
      %v945 = vpop.permute.xlu0 %944
      %946 = vrot.lane.b32.xlu0 %v839, 108
      %v947 = vpop.permute.xlu0 %946
      %948 = vrot.lane.b32.xlu0 %v840, 108
      %v949 = vpop.permute.xlu0 %948
      %950 = vrot.lane.b32.xlu0 %v841, 108
      %v951 = vpop.permute.xlu0 %950
      %vm952 = vcmask 883712
      %v953 = vsel %vm952, %v941, %v943
      %v954 = vsel %vm952, %v943, %v945
      %v955 = vsel %vm952, %v947, %v949
      %v956 = vsel %vm952, %v949, %v951
      %963 = vrot.lane.b32.xlu0 %v836, 92
      %v964 = vpop.permute.xlu0 %963
      %965 = vrot.lane.b32.xlu0 %v837, 92
      %v966 = vpop.permute.xlu0 %965
      %967 = vrot.lane.b32.xlu0 %v838, 92
      %v968 = vpop.permute.xlu0 %967
      %969 = vrot.lane.b32.xlu0 %v839, 92
      %v970 = vpop.permute.xlu0 %969
      %971 = vrot.lane.b32.xlu0 %v840, 92
      %v972 = vpop.permute.xlu0 %971
      %973 = vrot.lane.b32.xlu0 %v841, 92
      %v974 = vpop.permute.xlu0 %973
      %vm975 = vcmask 752640
      %v976 = vsel %vm975, %v964, %v966
      %v977 = vsel %vm975, %v966, %v968
      %v978 = vsel %vm975, %v970, %v972
      %v979 = vsel %vm975, %v972, %v974
      %986 = vrot.lane.b32.xlu0 %v836, 91
      %v987 = vpop.permute.xlu0 %986
      %988 = vrot.lane.b32.xlu0 %v837, 91
      %v989 = vpop.permute.xlu0 %988
      %990 = vrot.lane.b32.xlu0 %v838, 91
      %v991 = vpop.permute.xlu0 %990
      %992 = vrot.lane.b32.xlu0 %v839, 91
      %v993 = vpop.permute.xlu0 %992
      %994 = vrot.lane.b32.xlu0 %v840, 91
      %v995 = vpop.permute.xlu0 %994
      %996 = vrot.lane.b32.xlu0 %v841, 91
      %v997 = vpop.permute.xlu0 %996
      %vm998 = vcmask 744448
      %v999 = vsel %vm998, %v987, %v989
      %v1000 = vsel %vm998, %v989, %v991
      %v1001 = vsel %vm998, %v993, %v995
      %v1002 = vsel %vm998, %v995, %v997
      %1009 = vrot.lane.b32.xlu0 %v836, 90
      %v1010 = vpop.permute.xlu0 %1009
      %1011 = vrot.lane.b32.xlu0 %v837, 90
      %v1012 = vpop.permute.xlu0 %1011
      %1013 = vrot.lane.b32.xlu0 %v838, 90
      %v1014 = vpop.permute.xlu0 %1013
      %1015 = vrot.lane.b32.xlu0 %v839, 90
      %v1016 = vpop.permute.xlu0 %1015
      %1017 = vrot.lane.b32.xlu0 %v840, 90
      %v1018 = vpop.permute.xlu0 %1017
      %1019 = vrot.lane.b32.xlu0 %v841, 90
      %v1020 = vpop.permute.xlu0 %1019
      %vm1021 = vcmask 736256
      %v1022 = vsel %vm1021, %v1010, %v1012
      %v1023 = vsel %vm1021, %v1012, %v1014
      %v1024 = vsel %vm1021, %v1016, %v1018
      %v1025 = vsel %vm1021, %v1018, %v1020
      %v1032 = vld [vmem:[%s7] sm:$0xff]
      %v1033 = vld [vmem:[%s7 + $0x8] sm:$0xf]
      %v1034 = vld [vmem:[%s7 + $0xc] sm:$0xff]
      %v1035 = vld [vmem:[%s7 + $0x14] sm:$0xf]
      %v1036 = vld [vmem:[%s7 + $0x18] sm:$0xff]
      %v1037 = vld [vmem:[%s7 + $0x20] sm:$0xf]
      %v1038 = vld [vmem:[%s7 + $0x24] sm:$0xff]
      %v1039 = vld [vmem:[%s7 + $0x2c] sm:$0xf]
      %v1040 = vld [vmem:[%s8] sm:$0xff]
      %v1041 = vld [vmem:[%s8 + $0x8] sm:$0xff]
      %v1042 = vld [vmem:[%s8 + $0x10] sm:$0xff]
      %v1043 = vld [vmem:[%s8 + $0x18] sm:$0xff]
      %1045 = vset.pattern.permute.xlu0 0
      %1046 = vperm.xlu0 %1045, %v1040
      %v1047 = vpop.permute.xlu0 %1046
      %1050 = vset.pattern.permute.xlu0 0
      %1051 = vperm.xlu0 %1050, %v1041
      %v1052 = vpop.permute.xlu0 %1051
      %1055 = vset.pattern.permute.xlu0 0
      %1056 = vperm.xlu0 %1055, %v1042
      %v1057 = vpop.permute.xlu0 %1056
      %1060 = vset.pattern.permute.xlu0 0
      %1061 = vperm.xlu0 %1060, %v1043
      %v1062 = vpop.permute.xlu0 %1061
      %v1072 = vunpack.c.l.b16 %v1032
      %v1073 = vunpack.c.h.b16 %v1032
      %v1074 = vunpack.c.l.b16 %v1033
      %v1075 = vunpack.c.l.b16 %v1034
      %v1076 = vunpack.c.h.b16 %v1034
      %v1077 = vunpack.c.l.b16 %v1035
      %v1078 = vunpack.c.l.b16 %v1036
      %v1079 = vunpack.c.h.b16 %v1036
      %v1080 = vunpack.c.l.b16 %v1037
      %v1081 = vunpack.c.l.b16 %v1038
      %v1082 = vunpack.c.h.b16 %v1038
      %v1083 = vunpack.c.l.b16 %v1039
      %v1084 = vpack.c.b16 %v1075, %v1072
      %v1085 = vpack.c.b16 %v1076, %v1073
      %v1086 = vpack.c.b16 %v1077, %v1074
      %v1087 = vpack.c.b16 %v1081, %v1078
      %v1088 = vpack.c.b16 %v1082, %v1079
      %v1089 = vpack.c.b16 %v1083, %v1080
      %vm1094 = vcmask 261120
      %v1096 = vsel %vm1094, %v1086, 0
      %v1099 = vsel %vm1094, %v1089, 0
      %1101 = vmatpush.bf16.msra.mxu0 %v909
      %1102 = vmatpush.bf16.msra.mxu0 %v907
      %1103 = vmatpush.bf16.msra.mxu0 %v886
      %1104 = vmatpush.bf16.msra.mxu0 %v884
      %1105 = vmatpush.bf16.msra.mxu0 %v863
      %1106 = vmatpush.bf16.msra.mxu0 %v861
      %1107 = vmatpush.bf16.msra.mxu0 %v839
      %1108 = vmatpush.bf16.msra.mxu0 %v836
      %1109 = vmatmul.bf16.gmra.mxu0 %v1084
      %v1110 = vpop.f32.mrf.mxu0
      %v1111 = vadd.f32 %v1047, %v1110
      %v1112 = vpop.f32.mrf.mxu0
      %v1113 = vadd.f32 %v1052, %v1112
      %1114 = vmatmul.bf16.gmra.mxu0 %v1087
      %v1115 = vpop.f32.mrf.mxu0
      %v1116 = vadd.f32 %v1057, %v1115
      %v1117 = vpop.f32.mrf.mxu0
      %v1118 = vadd.f32 %v1062, %v1117
      %1119 = vdwg.mxu0
      %1120 = vmatpush.bf16.msra.mxu0 %v1001
      %1121 = vmatpush.bf16.msra.mxu0 %v999
      %1122 = vmatpush.bf16.msra.mxu0 %v978
      %1123 = vmatpush.bf16.msra.mxu0 %v976
      %1124 = vmatpush.bf16.msra.mxu0 %v955
      %1125 = vmatpush.bf16.msra.mxu0 %v953
      %1126 = vmatpush.bf16.msra.mxu0 %v932
      %1127 = vmatpush.bf16.msra.mxu0 %v930
      %1128 = vmatmul.bf16.gmra.mxu0 %v1085
      %v1129 = vpop.f32.mrf.mxu0
      %v1130 = vadd.f32 %v1111, %v1129
      %v1131 = vpop.f32.mrf.mxu0
      %v1132 = vadd.f32 %v1113, %v1131
      %1133 = vmatmul.bf16.gmra.mxu0 %v1088
      %v1134 = vpop.f32.mrf.mxu0
      %v1135 = vadd.f32 %v1116, %v1134
      %v1136 = vpop.f32.mrf.mxu0
      %v1137 = vadd.f32 %v1118, %v1136
      %1138 = vdwg.mxu0
      %1139 = vmatpush.bf16.msra.mxu0 0
      %1140 = vmatpush.bf16.msra.mxu0 0
      %1141 = vmatpush.bf16.msra.mxu0 0
      %1142 = vmatpush.bf16.msra.mxu0 0
      %1143 = vmatpush.bf16.msra.mxu0 0
      %1144 = vmatpush.bf16.msra.mxu0 0
      %1145 = vmatpush.bf16.msra.mxu0 %v1024
      %1146 = vmatpush.bf16.msra.mxu0 %v1022
      %1147 = vmatmul.bf16.gmra.mxu0 %v1096
      %v1148 = vpop.f32.mrf.mxu0
      %v1149 = vadd.f32 %v1130, %v1148
      %v1150 = vpop.f32.mrf.mxu0
      %v1151 = vadd.f32 %v1132, %v1150
      %1152 = vmatmul.bf16.gmra.mxu0 %v1099
      %v1153 = vpop.f32.mrf.mxu0
      %v1154 = vadd.f32 %v1135, %v1153
      %v1155 = vpop.f32.mrf.mxu0
      %v1156 = vadd.f32 %v1137, %v1155
      %1157 = vdwg.mxu0
      %1158 = vmatpush.bf16.msra.mxu0 %v910
      %1159 = vmatpush.bf16.msra.mxu0 %v908
      %1160 = vmatpush.bf16.msra.mxu0 %v887
      %1161 = vmatpush.bf16.msra.mxu0 %v885
      %1162 = vmatpush.bf16.msra.mxu0 %v864
      %1163 = vmatpush.bf16.msra.mxu0 %v862
      %1164 = vmatpush.bf16.msra.mxu0 %v840
      %1165 = vmatpush.bf16.msra.mxu0 %v837
      %1166 = vmatmul.bf16.gmra.mxu0 %v1084
      %v1167 = vpop.f32.mrf.mxu0
      %v1168 = vadd.f32 %v1047, %v1167
      %v1169 = vpop.f32.mrf.mxu0
      %v1170 = vadd.f32 %v1052, %v1169
      %1171 = vmatmul.bf16.gmra.mxu0 %v1087
      %v1172 = vpop.f32.mrf.mxu0
      %v1173 = vadd.f32 %v1057, %v1172
      %v1174 = vpop.f32.mrf.mxu0
      %v1175 = vadd.f32 %v1062, %v1174
      %1176 = vdwg.mxu0
      %1177 = vmatpush.bf16.msra.mxu0 %v1002
      %1178 = vmatpush.bf16.msra.mxu0 %v1000
      %1179 = vmatpush.bf16.msra.mxu0 %v979
      %1180 = vmatpush.bf16.msra.mxu0 %v977
      %1181 = vmatpush.bf16.msra.mxu0 %v956
      %1182 = vmatpush.bf16.msra.mxu0 %v954
      %1183 = vmatpush.bf16.msra.mxu0 %v933
      %1184 = vmatpush.bf16.msra.mxu0 %v931
      %1185 = vmatmul.bf16.gmra.mxu0 %v1085
      %v1186 = vpop.f32.mrf.mxu0
      %v1187 = vadd.f32 %v1168, %v1186
      %v1188 = vpop.f32.mrf.mxu0
      %v1189 = vadd.f32 %v1170, %v1188
      %1190 = vmatmul.bf16.gmra.mxu0 %v1088
      %v1191 = vpop.f32.mrf.mxu0
      %v1192 = vadd.f32 %v1173, %v1191
      %v1193 = vpop.f32.mrf.mxu0
      %v1194 = vadd.f32 %v1175, %v1193
      %1195 = vdwg.mxu0
      %1196 = vmatpush.bf16.msra.mxu0 0
      %1197 = vmatpush.bf16.msra.mxu0 0
      %1198 = vmatpush.bf16.msra.mxu0 0
      %1199 = vmatpush.bf16.msra.mxu0 0
      %1200 = vmatpush.bf16.msra.mxu0 0
      %1201 = vmatpush.bf16.msra.mxu0 0
      %1202 = vmatpush.bf16.msra.mxu0 %v1025
      %1203 = vmatpush.bf16.msra.mxu0 %v1023
      %1204 = vmatmul.bf16.gmra.mxu0 %v1096
      %v1205 = vpop.f32.mrf.mxu0
      %v1206 = vadd.f32 %v1187, %v1205
      %v1207 = vpop.f32.mrf.mxu0
      %v1208 = vadd.f32 %v1189, %v1207
      %1209 = vmatmul.bf16.gmra.mxu0 %v1099
      %v1210 = vpop.f32.mrf.mxu0
      %v1211 = vadd.f32 %v1192, %v1210
      %v1212 = vpop.f32.mrf.mxu0
      %v1213 = vadd.f32 %v1194, %v1212
      %1214 = vdwg.mxu0
      %1215 = vmatpush.bf16.msra.mxu0 %v905
      %1216 = vmatpush.bf16.msra.mxu0 %v899
      %1217 = vmatpush.bf16.msra.mxu0 %v882
      %1218 = vmatpush.bf16.msra.mxu0 %v876
      %1219 = vmatpush.bf16.msra.mxu0 %v859
      %1220 = vmatpush.bf16.msra.mxu0 %v853
      %1221 = vmatpush.bf16.msra.mxu0 %v841
      %1222 = vmatpush.bf16.msra.mxu0 %v838
      %1223 = vmatmul.bf16.gmra.mxu0 %v1084
      %v1224 = vpop.f32.mrf.mxu0
      %v1225 = vadd.f32 %v1047, %v1224
      %v1226 = vpop.f32.mrf.mxu0
      %v1227 = vadd.f32 %v1052, %v1226
      %1228 = vmatmul.bf16.gmra.mxu0 %v1087
      %v1229 = vpop.f32.mrf.mxu0
      %v1230 = vadd.f32 %v1057, %v1229
      %v1231 = vpop.f32.mrf.mxu0
      %v1232 = vadd.f32 %v1062, %v1231
      %1233 = vdwg.mxu0
      %1234 = vmatpush.bf16.msra.mxu0 %v997
      %1235 = vmatpush.bf16.msra.mxu0 %v991
      %1236 = vmatpush.bf16.msra.mxu0 %v974
      %1237 = vmatpush.bf16.msra.mxu0 %v968
      %1238 = vmatpush.bf16.msra.mxu0 %v951
      %1239 = vmatpush.bf16.msra.mxu0 %v945
      %1240 = vmatpush.bf16.msra.mxu0 %v928
      %1241 = vmatpush.bf16.msra.mxu0 %v922
      %1242 = vmatmul.bf16.gmra.mxu0 %v1085
      %v1243 = vpop.f32.mrf.mxu0
      %v1244 = vadd.f32 %v1225, %v1243
      %v1245 = vpop.f32.mrf.mxu0
      %v1246 = vadd.f32 %v1227, %v1245
      %1247 = vmatmul.bf16.gmra.mxu0 %v1088
      %v1248 = vpop.f32.mrf.mxu0
      %v1249 = vadd.f32 %v1230, %v1248
      %v1250 = vpop.f32.mrf.mxu0
      %v1251 = vadd.f32 %v1232, %v1250
      %1252 = vdwg.mxu0
      %1253 = vmatpush.bf16.msra.mxu0 0
      %1254 = vmatpush.bf16.msra.mxu0 0
      %1255 = vmatpush.bf16.msra.mxu0 0
      %1256 = vmatpush.bf16.msra.mxu0 0
      %1257 = vmatpush.bf16.msra.mxu0 0
      %1258 = vmatpush.bf16.msra.mxu0 0
      %1259 = vmatpush.bf16.msra.mxu0 %v1020
      %1260 = vmatpush.bf16.msra.mxu0 %v1014
      %1261 = vmatmul.bf16.gmra.mxu0 %v1096
      %v1262 = vpop.f32.mrf.mxu0
      %v1263 = vadd.f32 %v1244, %v1262
      %v1264 = vpop.f32.mrf.mxu0
      %v1265 = vadd.f32 %v1246, %v1264
      %1266 = vmatmul.bf16.gmra.mxu0 %v1099
      %v1267 = vpop.f32.mrf.mxu0
      %v1268 = vadd.f32 %v1249, %v1267
      %v1269 = vpop.f32.mrf.mxu0
      %v1270 = vadd.f32 %v1251, %v1269
      %1271 = vdwg.mxu0
      %v1272 = vmax.f32 %v1149, 0.0
      %v1273 = vmax.f32 %v1206, 0.0
      %v1274 = vmax.f32 %v1263, 0.0
      %v1275 = vmax.f32 %v1151, 0.0
      %v1276 = vmax.f32 %v1208, 0.0
      %v1277 = vmax.f32 %v1265, 0.0
      %v1278 = vmax.f32 %v1154, 0.0
      %v1279 = vmax.f32 %v1211, 0.0
      %v1280 = vmax.f32 %v1268, 0.0
      %v1281 = vmax.f32 %v1156, 0.0
      %v1282 = vmax.f32 %v1213, 0.0
      %v1283 = vmax.f32 %v1270, 0.0
      %v1284 = vmul.f32 %v1272, %v715
      %v1285 = vmul.f32 %v1273, %v716
      %v1286 = vmul.f32 %v1274, %v717
      %v1287 = vmul.f32 %v1275, %v715
      %v1288 = vmul.f32 %v1276, %v716
      %v1289 = vmul.f32 %v1277, %v717
      %v1290 = vmul.f32 %v1278, %v715
      %v1291 = vmul.f32 %v1279, %v716
      %v1292 = vmul.f32 %v1280, %v717
      %v1293 = vmul.f32 %v1281, %v715
      %v1294 = vmul.f32 %v1282, %v716
      %v1295 = vmul.f32 %v1283, %v717
      %1296 = vst.msk [vmem:[#allocation3] sm:$0xf] %vm733, 0
      %1297 = vst.msk [vmem:[#allocation3 + $0xc] sm:$0xf] %vm733, 0
      %1298 = vst.msk [vmem:[#allocation3 + $0x18] sm:$0xf] %vm733, 0
      %1299 = vst.msk [vmem:[#allocation3 + $0x24] sm:$0xf] %vm733, 0
      %v1300 = vpack.c.bf16 %v1285, %v1284
      %v1301 = vpack.c.bf16 %v1286, %v1286
      %v1302 = vpack.c.bf16 %v1288, %v1287
      %v1303 = vpack.c.bf16 %v1289, %v1289
      %v1304 = vpack.c.bf16 %v1291, %v1290
      %v1305 = vpack.c.bf16 %v1292, %v1292
      %v1306 = vpack.c.bf16 %v1294, %v1293
      %v1307 = vpack.c.bf16 %v1295, %v1295
      %1316 = vrot.lane.b32.xlu0 %v1300, 19
      %v1317 = vpop.permute.xlu0 %1316
      %1318 = vrot.lane.b32.xlu0 %v1301, 19
      %v1319 = vpop.permute.xlu0 %1318
      %1320 = vrot.lane.b32.xlu0 %v1302, 19
      %v1321 = vpop.permute.xlu0 %1320
      %1322 = vrot.lane.b32.xlu0 %v1303, 19
      %v1323 = vpop.permute.xlu0 %1322
      %1324 = vrot.lane.b32.xlu0 %v1304, 19
      %v1325 = vpop.permute.xlu0 %1324
      %1326 = vrot.lane.b32.xlu0 %v1305, 19
      %v1327 = vpop.permute.xlu0 %1326
      %1328 = vrot.lane.b32.xlu0 %v1306, 19
      %v1329 = vpop.permute.xlu0 %1328
      %1330 = vrot.lane.b32.xlu0 %v1307, 19
      %v1331 = vpop.permute.xlu0 %1330
      %v1332 = vrot.slane %v1317, 4
      %v1333 = vrot.slane %v1321, 4
      %v1334 = vrot.slane %v1325, 4
      %v1335 = vrot.slane %v1329, 4
      %v1336 = vsel %vm774, %v1332, %v1317
      %v1337 = vsel %vm774, %v1332, %v1319
      %v1338 = vsel %vm774, %v1333, %v1321
      %v1339 = vsel %vm774, %v1333, %v1323
      %v1340 = vsel %vm774, %v1334, %v1325
      %v1341 = vsel %vm774, %v1334, %v1327
      %v1342 = vsel %vm774, %v1335, %v1329
      %v1343 = vsel %vm774, %v1335, %v1331
      %1352 = vst.msk [vmem:[#allocation3] sm:$0xff] %vm793, %v1336
      %1353 = vst.msk [vmem:[#allocation3 + $0x8] sm:$0xf] %vm795, %v1337
      %1354 = vst.msk [vmem:[#allocation3 + $0xc] sm:$0xff] %vm793, %v1338
      %1355 = vst.msk [vmem:[#allocation3 + $0x14] sm:$0xf] %vm795, %v1339
      %1356 = vst.msk [vmem:[#allocation3 + $0x18] sm:$0xff] %vm793, %v1340
      %1357 = vst.msk [vmem:[#allocation3 + $0x20] sm:$0xf] %vm795, %v1341
      %1358 = vst.msk [vmem:[#allocation3 + $0x24] sm:$0xff] %vm793, %v1342
      %1359 = vst.msk [vmem:[#allocation3 + $0x2c] sm:$0xf] %vm795, %v1343
      %1360 = vst.msk [vmem:[#allocation3 + $0x8] sm:$0xf] %vm803, 0
      %1361 = vst.msk [vmem:[#allocation3 + $0x14] sm:$0xf] %vm803, 0
      %1362 = vst.msk [vmem:[#allocation3 + $0x20] sm:$0xf] %vm803, 0
      %1363 = vst.msk [vmem:[#allocation3 + $0x2c] sm:$0xf] %vm803, 0
      %v1364 = vld [vmem:[#allocation3] sm:$0xff]
      %v1365 = vld [vmem:[#allocation3 + $0x8] sm:$0xf]
      %v1366 = vld [vmem:[#allocation3 + $0xc] sm:$0xff]
      %v1367 = vld [vmem:[#allocation3 + $0x14] sm:$0xf]
      %v1368 = vld [vmem:[#allocation3 + $0x18] sm:$0xff]
      %v1369 = vld [vmem:[#allocation3 + $0x20] sm:$0xf]
      %v1370 = vld [vmem:[#allocation3 + $0x24] sm:$0xff]
      %v1371 = vld [vmem:[#allocation3 + $0x2c] sm:$0xf]
      %v1380 = vunpack.c.l.b16 %v1364
      %v1381 = vunpack.c.h.b16 %v1364
      %v1382 = vunpack.c.l.b16 %v1365
      %v1383 = vunpack.c.l.b16 %v1366
      %v1384 = vunpack.c.h.b16 %v1366
      %v1385 = vunpack.c.l.b16 %v1367
      %v1386 = vunpack.c.l.b16 %v1368
      %v1387 = vunpack.c.h.b16 %v1368
      %v1388 = vunpack.c.l.b16 %v1369
      %v1389 = vunpack.c.l.b16 %v1370
      %v1390 = vunpack.c.h.b16 %v1370
      %v1391 = vunpack.c.l.b16 %v1371
      %v1392 = vpack.c.b16 %v1383, %v1380
      %v1393 = vpack.c.b16 %v1384, %v1381
      %v1394 = vpack.c.b16 %v1385, %v1382
      %v1395 = vpack.c.b16 %v1389, %v1386
      %v1396 = vpack.c.b16 %v1390, %v1387
      %v1397 = vpack.c.b16 %v1391, %v1388
      %1404 = vrot.lane.b32.xlu0 %v1392, 127
      %v1405 = vpop.permute.xlu0 %1404
      %1406 = vrot.lane.b32.xlu0 %v1393, 127
      %v1407 = vpop.permute.xlu0 %1406
      %1408 = vrot.lane.b32.xlu0 %v1394, 127
      %v1409 = vpop.permute.xlu0 %1408
      %1410 = vrot.lane.b32.xlu0 %v1395, 127
      %v1411 = vpop.permute.xlu0 %1410
      %1412 = vrot.lane.b32.xlu0 %v1396, 127
      %v1413 = vpop.permute.xlu0 %1412
      %1414 = vrot.lane.b32.xlu0 %v1397, 127
      %v1415 = vpop.permute.xlu0 %1414
      %v1416 = vsel %vm860, %v1405, %v1407
      %v1417 = vsel %vm860, %v1407, %v1409
      %v1418 = vsel %vm860, %v1411, %v1413
      %v1419 = vsel %vm860, %v1413, %v1415
      %1426 = vrot.lane.b32.xlu0 %v1392, 126
      %v1427 = vpop.permute.xlu0 %1426
      %1428 = vrot.lane.b32.xlu0 %v1393, 126
      %v1429 = vpop.permute.xlu0 %1428
      %1430 = vrot.lane.b32.xlu0 %v1394, 126
      %v1431 = vpop.permute.xlu0 %1430
      %1432 = vrot.lane.b32.xlu0 %v1395, 126
      %v1433 = vpop.permute.xlu0 %1432
      %1434 = vrot.lane.b32.xlu0 %v1396, 126
      %v1435 = vpop.permute.xlu0 %1434
      %1436 = vrot.lane.b32.xlu0 %v1397, 126
      %v1437 = vpop.permute.xlu0 %1436
      %v1438 = vsel %vm883, %v1427, %v1429
      %v1439 = vsel %vm883, %v1429, %v1431
      %v1440 = vsel %vm883, %v1433, %v1435
      %v1441 = vsel %vm883, %v1435, %v1437
      %1448 = vrot.lane.b32.xlu0 %v1392, 110
      %v1449 = vpop.permute.xlu0 %1448
      %1450 = vrot.lane.b32.xlu0 %v1393, 110
      %v1451 = vpop.permute.xlu0 %1450
      %1452 = vrot.lane.b32.xlu0 %v1394, 110
      %v1453 = vpop.permute.xlu0 %1452
      %1454 = vrot.lane.b32.xlu0 %v1395, 110
      %v1455 = vpop.permute.xlu0 %1454
      %1456 = vrot.lane.b32.xlu0 %v1396, 110
      %v1457 = vpop.permute.xlu0 %1456
      %1458 = vrot.lane.b32.xlu0 %v1397, 110
      %v1459 = vpop.permute.xlu0 %1458
      %v1460 = vsel %vm906, %v1449, %v1451
      %v1461 = vsel %vm906, %v1451, %v1453
      %v1462 = vsel %vm906, %v1455, %v1457
      %v1463 = vsel %vm906, %v1457, %v1459
      %1470 = vrot.lane.b32.xlu0 %v1392, 109
      %v1471 = vpop.permute.xlu0 %1470
      %1472 = vrot.lane.b32.xlu0 %v1393, 109
      %v1473 = vpop.permute.xlu0 %1472
      %1474 = vrot.lane.b32.xlu0 %v1394, 109
      %v1475 = vpop.permute.xlu0 %1474
      %1476 = vrot.lane.b32.xlu0 %v1395, 109
      %v1477 = vpop.permute.xlu0 %1476
      %1478 = vrot.lane.b32.xlu0 %v1396, 109
      %v1479 = vpop.permute.xlu0 %1478
      %1480 = vrot.lane.b32.xlu0 %v1397, 109
      %v1481 = vpop.permute.xlu0 %1480
      %v1482 = vsel %vm929, %v1471, %v1473
      %v1483 = vsel %vm929, %v1473, %v1475
      %v1484 = vsel %vm929, %v1477, %v1479
      %v1485 = vsel %vm929, %v1479, %v1481
      %1492 = vrot.lane.b32.xlu0 %v1392, 108
      %v1493 = vpop.permute.xlu0 %1492
      %1494 = vrot.lane.b32.xlu0 %v1393, 108
      %v1495 = vpop.permute.xlu0 %1494
      %1496 = vrot.lane.b32.xlu0 %v1394, 108
      %v1497 = vpop.permute.xlu0 %1496
      %1498 = vrot.lane.b32.xlu0 %v1395, 108
      %v1499 = vpop.permute.xlu0 %1498
      %1500 = vrot.lane.b32.xlu0 %v1396, 108
      %v1501 = vpop.permute.xlu0 %1500
      %1502 = vrot.lane.b32.xlu0 %v1397, 108
      %v1503 = vpop.permute.xlu0 %1502
      %v1504 = vsel %vm952, %v1493, %v1495
      %v1505 = vsel %vm952, %v1495, %v1497
      %v1506 = vsel %vm952, %v1499, %v1501
      %v1507 = vsel %vm952, %v1501, %v1503
      %1514 = vrot.lane.b32.xlu0 %v1392, 92
      %v1515 = vpop.permute.xlu0 %1514
      %1516 = vrot.lane.b32.xlu0 %v1393, 92
      %v1517 = vpop.permute.xlu0 %1516
      %1518 = vrot.lane.b32.xlu0 %v1394, 92
      %v1519 = vpop.permute.xlu0 %1518
      %1520 = vrot.lane.b32.xlu0 %v1395, 92
      %v1521 = vpop.permute.xlu0 %1520
      %1522 = vrot.lane.b32.xlu0 %v1396, 92
      %v1523 = vpop.permute.xlu0 %1522
      %1524 = vrot.lane.b32.xlu0 %v1397, 92
      %v1525 = vpop.permute.xlu0 %1524
      %v1526 = vsel %vm975, %v1515, %v1517
      %v1527 = vsel %vm975, %v1517, %v1519
      %v1528 = vsel %vm975, %v1521, %v1523
      %v1529 = vsel %vm975, %v1523, %v1525
      %1536 = vrot.lane.b32.xlu0 %v1392, 91
      %v1537 = vpop.permute.xlu0 %1536
      %1538 = vrot.lane.b32.xlu0 %v1393, 91
      %v1539 = vpop.permute.xlu0 %1538
      %1540 = vrot.lane.b32.xlu0 %v1394, 91
      %v1541 = vpop.permute.xlu0 %1540
      %1542 = vrot.lane.b32.xlu0 %v1395, 91
      %v1543 = vpop.permute.xlu0 %1542
      %1544 = vrot.lane.b32.xlu0 %v1396, 91
      %v1545 = vpop.permute.xlu0 %1544
      %1546 = vrot.lane.b32.xlu0 %v1397, 91
      %v1547 = vpop.permute.xlu0 %1546
      %v1548 = vsel %vm998, %v1537, %v1539
      %v1549 = vsel %vm998, %v1539, %v1541
      %v1550 = vsel %vm998, %v1543, %v1545
      %v1551 = vsel %vm998, %v1545, %v1547
      %1558 = vrot.lane.b32.xlu0 %v1392, 90
      %v1559 = vpop.permute.xlu0 %1558
      %1560 = vrot.lane.b32.xlu0 %v1393, 90
      %v1561 = vpop.permute.xlu0 %1560
      %1562 = vrot.lane.b32.xlu0 %v1394, 90
      %v1563 = vpop.permute.xlu0 %1562
      %1564 = vrot.lane.b32.xlu0 %v1395, 90
      %v1565 = vpop.permute.xlu0 %1564
      %1566 = vrot.lane.b32.xlu0 %v1396, 90
      %v1567 = vpop.permute.xlu0 %1566
      %1568 = vrot.lane.b32.xlu0 %v1397, 90
      %v1569 = vpop.permute.xlu0 %1568
      %v1570 = vsel %vm1021, %v1559, %v1561
      %v1571 = vsel %vm1021, %v1561, %v1563
      %v1572 = vsel %vm1021, %v1565, %v1567
      %v1573 = vsel %vm1021, %v1567, %v1569
      %v1580 = vld [vmem:[%s9] sm:$0xff]
      %v1581 = vld [vmem:[%s9 + $0x8] sm:$0xf]
      %v1582 = vld [vmem:[%s9 + $0xc] sm:$0xff]
      %v1583 = vld [vmem:[%s9 + $0x14] sm:$0xf]
      %v1584 = vld [vmem:[%s9 + $0x18] sm:$0xff]
      %v1585 = vld [vmem:[%s9 + $0x20] sm:$0xf]
      %v1586 = vld [vmem:[%s9 + $0x24] sm:$0xff]
      %v1587 = vld [vmem:[%s9 + $0x2c] sm:$0xf]
      %v1588 = vld [vmem:[%s10] sm:$0xff]
      %v1589 = vld [vmem:[%s10 + $0x8] sm:$0xff]
      %v1590 = vld [vmem:[%s10 + $0x10] sm:$0xff]
      %v1591 = vld [vmem:[%s10 + $0x18] sm:$0xff]
      %1593 = vset.pattern.permute.xlu0 0
      %1594 = vperm.xlu0 %1593, %v1588
      %v1595 = vpop.permute.xlu0 %1594
      %1598 = vset.pattern.permute.xlu0 0
      %1599 = vperm.xlu0 %1598, %v1589
      %v1600 = vpop.permute.xlu0 %1599
      %1603 = vset.pattern.permute.xlu0 0
      %1604 = vperm.xlu0 %1603, %v1590
      %v1605 = vpop.permute.xlu0 %1604
      %1608 = vset.pattern.permute.xlu0 0
      %1609 = vperm.xlu0 %1608, %v1591
      %v1610 = vpop.permute.xlu0 %1609
      %v1620 = vunpack.c.l.b16 %v1580
      %v1621 = vunpack.c.h.b16 %v1580
      %v1622 = vunpack.c.l.b16 %v1581
      %v1623 = vunpack.c.l.b16 %v1582
      %v1624 = vunpack.c.h.b16 %v1582
      %v1625 = vunpack.c.l.b16 %v1583
      %v1626 = vunpack.c.l.b16 %v1584
      %v1627 = vunpack.c.h.b16 %v1584
      %v1628 = vunpack.c.l.b16 %v1585
      %v1629 = vunpack.c.l.b16 %v1586
      %v1630 = vunpack.c.h.b16 %v1586
      %v1631 = vunpack.c.l.b16 %v1587
      %v1632 = vpack.c.b16 %v1623, %v1620
      %v1633 = vpack.c.b16 %v1624, %v1621
      %v1634 = vpack.c.b16 %v1625, %v1622
      %v1635 = vpack.c.b16 %v1629, %v1626
      %v1636 = vpack.c.b16 %v1630, %v1627
      %v1637 = vpack.c.b16 %v1631, %v1628
      %v1643 = vsel %vm1094, %v1634, 0
      %v1646 = vsel %vm1094, %v1637, 0
      %1648 = vmatpush.bf16.msra.mxu0 %v1462
      %1649 = vmatpush.bf16.msra.mxu0 %v1460
      %1650 = vmatpush.bf16.msra.mxu0 %v1440
      %1651 = vmatpush.bf16.msra.mxu0 %v1438
      %1652 = vmatpush.bf16.msra.mxu0 %v1418
      %1653 = vmatpush.bf16.msra.mxu0 %v1416
      %1654 = vmatpush.bf16.msra.mxu0 %v1395
      %1655 = vmatpush.bf16.msra.mxu0 %v1392
      %1656 = vmatmul.bf16.gmra.mxu0 %v1632
      %v1657 = vpop.f32.mrf.mxu0
      %v1658 = vadd.f32 %v1595, %v1657
      %v1659 = vpop.f32.mrf.mxu0
      %v1660 = vadd.f32 %v1600, %v1659
      %1661 = vmatmul.bf16.gmra.mxu0 %v1635
      %v1662 = vpop.f32.mrf.mxu0
      %v1663 = vadd.f32 %v1605, %v1662
      %v1664 = vpop.f32.mrf.mxu0
      %v1665 = vadd.f32 %v1610, %v1664
      %1666 = vdwg.mxu0
      %1667 = vmatpush.bf16.msra.mxu0 %v1550
      %1668 = vmatpush.bf16.msra.mxu0 %v1548
      %1669 = vmatpush.bf16.msra.mxu0 %v1528
      %1670 = vmatpush.bf16.msra.mxu0 %v1526
      %1671 = vmatpush.bf16.msra.mxu0 %v1506
      %1672 = vmatpush.bf16.msra.mxu0 %v1504
      %1673 = vmatpush.bf16.msra.mxu0 %v1484
      %1674 = vmatpush.bf16.msra.mxu0 %v1482
      %1675 = vmatmul.bf16.gmra.mxu0 %v1633
      %v1676 = vpop.f32.mrf.mxu0
      %v1677 = vadd.f32 %v1658, %v1676
      %v1678 = vpop.f32.mrf.mxu0
      %v1679 = vadd.f32 %v1660, %v1678
      %1680 = vmatmul.bf16.gmra.mxu0 %v1636
      %v1681 = vpop.f32.mrf.mxu0
      %v1682 = vadd.f32 %v1663, %v1681
      %v1683 = vpop.f32.mrf.mxu0
      %v1684 = vadd.f32 %v1665, %v1683
      %1685 = vdwg.mxu0
      %1686 = vmatpush.bf16.msra.mxu0 0
      %1687 = vmatpush.bf16.msra.mxu0 0
      %1688 = vmatpush.bf16.msra.mxu0 0
      %1689 = vmatpush.bf16.msra.mxu0 0
      %1690 = vmatpush.bf16.msra.mxu0 0
      %1691 = vmatpush.bf16.msra.mxu0 0
      %1692 = vmatpush.bf16.msra.mxu0 %v1572
      %1693 = vmatpush.bf16.msra.mxu0 %v1570
      %1694 = vmatmul.bf16.gmra.mxu0 %v1643
      %v1695 = vpop.f32.mrf.mxu0
      %v1696 = vadd.f32 %v1677, %v1695
      %v1697 = vpop.f32.mrf.mxu0
      %v1698 = vadd.f32 %v1679, %v1697
      %1699 = vmatmul.bf16.gmra.mxu0 %v1646
      %v1700 = vpop.f32.mrf.mxu0
      %v1701 = vadd.f32 %v1682, %v1700
      %v1702 = vpop.f32.mrf.mxu0
      %v1703 = vadd.f32 %v1684, %v1702
      %1704 = vdwg.mxu0
      %1705 = vmatpush.bf16.msra.mxu0 %v1463
      %1706 = vmatpush.bf16.msra.mxu0 %v1461
      %1707 = vmatpush.bf16.msra.mxu0 %v1441
      %1708 = vmatpush.bf16.msra.mxu0 %v1439
      %1709 = vmatpush.bf16.msra.mxu0 %v1419
      %1710 = vmatpush.bf16.msra.mxu0 %v1417
      %1711 = vmatpush.bf16.msra.mxu0 %v1396
      %1712 = vmatpush.bf16.msra.mxu0 %v1393
      %1713 = vmatmul.bf16.gmra.mxu0 %v1632
      %v1714 = vpop.f32.mrf.mxu0
      %v1715 = vadd.f32 %v1595, %v1714
      %v1716 = vpop.f32.mrf.mxu0
      %v1717 = vadd.f32 %v1600, %v1716
      %1718 = vmatmul.bf16.gmra.mxu0 %v1635
      %v1719 = vpop.f32.mrf.mxu0
      %v1720 = vadd.f32 %v1605, %v1719
      %v1721 = vpop.f32.mrf.mxu0
      %v1722 = vadd.f32 %v1610, %v1721
      %1723 = vdwg.mxu0
      %1724 = vmatpush.bf16.msra.mxu0 %v1551
      %1725 = vmatpush.bf16.msra.mxu0 %v1549
      %1726 = vmatpush.bf16.msra.mxu0 %v1529
      %1727 = vmatpush.bf16.msra.mxu0 %v1527
      %1728 = vmatpush.bf16.msra.mxu0 %v1507
      %1729 = vmatpush.bf16.msra.mxu0 %v1505
      %1730 = vmatpush.bf16.msra.mxu0 %v1485
      %1731 = vmatpush.bf16.msra.mxu0 %v1483
      %1732 = vmatmul.bf16.gmra.mxu0 %v1633
      %v1733 = vpop.f32.mrf.mxu0
      %v1734 = vadd.f32 %v1715, %v1733
      %v1735 = vpop.f32.mrf.mxu0
      %v1736 = vadd.f32 %v1717, %v1735
      %1737 = vmatmul.bf16.gmra.mxu0 %v1636
      %v1738 = vpop.f32.mrf.mxu0
      %v1739 = vadd.f32 %v1720, %v1738
      %v1740 = vpop.f32.mrf.mxu0
      %v1741 = vadd.f32 %v1722, %v1740
      %1742 = vdwg.mxu0
      %1743 = vmatpush.bf16.msra.mxu0 0
      %1744 = vmatpush.bf16.msra.mxu0 0
      %1745 = vmatpush.bf16.msra.mxu0 0
      %1746 = vmatpush.bf16.msra.mxu0 0
      %1747 = vmatpush.bf16.msra.mxu0 0
      %1748 = vmatpush.bf16.msra.mxu0 0
      %1749 = vmatpush.bf16.msra.mxu0 %v1573
      %1750 = vmatpush.bf16.msra.mxu0 %v1571
      %1751 = vmatmul.bf16.gmra.mxu0 %v1643
      %v1752 = vpop.f32.mrf.mxu0
      %v1753 = vadd.f32 %v1734, %v1752
      %v1754 = vpop.f32.mrf.mxu0
      %v1755 = vadd.f32 %v1736, %v1754
      %1756 = vmatmul.bf16.gmra.mxu0 %v1646
      %v1757 = vpop.f32.mrf.mxu0
      %v1758 = vadd.f32 %v1739, %v1757
      %v1759 = vpop.f32.mrf.mxu0
      %v1760 = vadd.f32 %v1741, %v1759
      %1761 = vdwg.mxu0
      %1762 = vmatpush.bf16.msra.mxu0 %v1459
      %1763 = vmatpush.bf16.msra.mxu0 %v1453
      %1764 = vmatpush.bf16.msra.mxu0 %v1437
      %1765 = vmatpush.bf16.msra.mxu0 %v1431
      %1766 = vmatpush.bf16.msra.mxu0 %v1415
      %1767 = vmatpush.bf16.msra.mxu0 %v1409
      %1768 = vmatpush.bf16.msra.mxu0 %v1397
      %1769 = vmatpush.bf16.msra.mxu0 %v1394
      %1770 = vmatmul.bf16.gmra.mxu0 %v1632
      %v1771 = vpop.f32.mrf.mxu0
      %v1772 = vadd.f32 %v1595, %v1771
      %v1773 = vpop.f32.mrf.mxu0
      %v1774 = vadd.f32 %v1600, %v1773
      %1775 = vmatmul.bf16.gmra.mxu0 %v1635
      %v1776 = vpop.f32.mrf.mxu0
      %v1777 = vadd.f32 %v1605, %v1776
      %v1778 = vpop.f32.mrf.mxu0
      %v1779 = vadd.f32 %v1610, %v1778
      %1780 = vdwg.mxu0
      %1781 = vmatpush.bf16.msra.mxu0 %v1547
      %1782 = vmatpush.bf16.msra.mxu0 %v1541
      %1783 = vmatpush.bf16.msra.mxu0 %v1525
      %1784 = vmatpush.bf16.msra.mxu0 %v1519
      %1785 = vmatpush.bf16.msra.mxu0 %v1503
      %1786 = vmatpush.bf16.msra.mxu0 %v1497
      %1787 = vmatpush.bf16.msra.mxu0 %v1481
      %1788 = vmatpush.bf16.msra.mxu0 %v1475
      %1789 = vmatmul.bf16.gmra.mxu0 %v1633
      %v1790 = vpop.f32.mrf.mxu0
      %v1791 = vadd.f32 %v1772, %v1790
      %v1792 = vpop.f32.mrf.mxu0
      %v1793 = vadd.f32 %v1774, %v1792
      %1794 = vmatmul.bf16.gmra.mxu0 %v1636
      %v1795 = vpop.f32.mrf.mxu0
      %v1796 = vadd.f32 %v1777, %v1795
      %v1797 = vpop.f32.mrf.mxu0
      %v1798 = vadd.f32 %v1779, %v1797
      %1799 = vdwg.mxu0
      %1800 = vmatpush.bf16.msra.mxu0 0
      %1801 = vmatpush.bf16.msra.mxu0 0
      %1802 = vmatpush.bf16.msra.mxu0 0
      %1803 = vmatpush.bf16.msra.mxu0 0
      %1804 = vmatpush.bf16.msra.mxu0 0
      %1805 = vmatpush.bf16.msra.mxu0 0
      %1806 = vmatpush.bf16.msra.mxu0 %v1569
      %1807 = vmatpush.bf16.msra.mxu0 %v1563
      %1808 = vmatmul.bf16.gmra.mxu0 %v1643
      %v1809 = vpop.f32.mrf.mxu0
      %v1810 = vadd.f32 %v1791, %v1809
      %v1811 = vpop.f32.mrf.mxu0
      %v1812 = vadd.f32 %v1793, %v1811
      %1813 = vmatmul.bf16.gmra.mxu0 %v1646
      %v1814 = vpop.f32.mrf.mxu0
      %v1815 = vadd.f32 %v1796, %v1814
      %v1816 = vpop.f32.mrf.mxu0
      %v1817 = vadd.f32 %v1798, %v1816
      %1818 = vdwg.mxu0
      %v1819 = vmax.f32 %v1696, 0.0
      %v1820 = vmax.f32 %v1753, 0.0
      %v1821 = vmax.f32 %v1810, 0.0
      %v1822 = vmax.f32 %v1698, 0.0
      %v1823 = vmax.f32 %v1755, 0.0
      %v1824 = vmax.f32 %v1812, 0.0
      %v1825 = vmax.f32 %v1701, 0.0
      %v1826 = vmax.f32 %v1758, 0.0
      %v1827 = vmax.f32 %v1815, 0.0
      %v1828 = vmax.f32 %v1703, 0.0
      %v1829 = vmax.f32 %v1760, 0.0
      %v1830 = vmax.f32 %v1817, 0.0
      %v1831 = vmul.f32 %v1819, %v715
      %v1832 = vmul.f32 %v1820, %v716
      %v1833 = vmul.f32 %v1821, %v717
      %v1834 = vmul.f32 %v1822, %v715
      %v1835 = vmul.f32 %v1823, %v716
      %v1836 = vmul.f32 %v1824, %v717
      %v1837 = vmul.f32 %v1825, %v715
      %v1838 = vmul.f32 %v1826, %v716
      %v1839 = vmul.f32 %v1827, %v717
      %v1840 = vmul.f32 %v1828, %v715
      %v1841 = vmul.f32 %v1829, %v716
      %v1842 = vmul.f32 %v1830, %v717
      %v1843 = vld [vmem:[%s11] sm:$0xf]
      %v1844 = vld [vmem:[%s11 + $0x4] sm:$0xf]
      %v1845 = vpack.c.bf16 %v1834, %v1831
      %v1846 = vpack.c.bf16 %v1835, %v1832
      %v1847 = vpack.c.bf16 %v1836, %v1833
      %v1848 = vpack.c.bf16 %v1840, %v1837
      %v1849 = vpack.c.bf16 %v1841, %v1838
      %v1850 = vpack.c.bf16 %v1842, %v1839
      %v1851 = vld [vmem:[%s12] sm:$0xff]
      %v1852 = vld [vmem:[%s12 + $0x8] sm:$0xff]
      %1854 = vset.pattern.permute.xlu0 0
      %1855 = vperm.xlu0 %1854, %v1851
      %v1856 = vpop.permute.xlu0 %1855
      %1859 = vset.pattern.permute.xlu0 0
      %1860 = vperm.xlu0 %1859, %v1852
      %v1861 = vpop.permute.xlu0 %1860
      %v1865 = vunpack.c.l.b16 %v1843
      %v1866 = vunpack.c.l.b16 %v1844
      %v1867 = vpack.c.b16 %v1866, %v1865
      %v1869 = vsel %vm1094, %v1867, 0
      %1871 = vmatpush.bf16.msra.mxu0 0
      %1872 = vmatpush.bf16.msra.mxu0 0
      %1873 = vmatpush.bf16.msra.mxu0 0
      %1874 = vmatpush.bf16.msra.mxu0 0
      %1875 = vmatpush.bf16.msra.mxu0 0
      %1876 = vmatpush.bf16.msra.mxu0 0
      %1877 = vmatpush.bf16.msra.mxu0 %v1848
      %1878 = vmatpush.bf16.msra.mxu0 %v1845
      %1879 = vmatmul.bf16.gmra.mxu0 %v1869
      %v1880 = vpop.f32.mrf.mxu0
      %v1881 = vadd.f32 %v1856, %v1880
      %v1882 = vpop.f32.mrf.mxu0
      %v1883 = vadd.f32 %v1861, %v1882
      %1884 = vdwg.mxu0
      %1885 = vmatpush.bf16.msra.mxu0 0
      %1886 = vmatpush.bf16.msra.mxu0 0
      %1887 = vmatpush.bf16.msra.mxu0 0
      %1888 = vmatpush.bf16.msra.mxu0 0
      %1889 = vmatpush.bf16.msra.mxu0 0
      %1890 = vmatpush.bf16.msra.mxu0 0
      %1891 = vmatpush.bf16.msra.mxu0 %v1849
      %1892 = vmatpush.bf16.msra.mxu0 %v1846
      %1893 = vmatmul.bf16.gmra.mxu0 %v1869
      %v1894 = vpop.f32.mrf.mxu0
      %v1895 = vadd.f32 %v1856, %v1894
      %v1896 = vpop.f32.mrf.mxu0
      %v1897 = vadd.f32 %v1861, %v1896
      %1898 = vdwg.mxu0
      %1899 = vmatpush.bf16.msra.mxu0 0
      %1900 = vmatpush.bf16.msra.mxu0 0
      %1901 = vmatpush.bf16.msra.mxu0 0
      %1902 = vmatpush.bf16.msra.mxu0 0
      %1903 = vmatpush.bf16.msra.mxu0 0
      %1904 = vmatpush.bf16.msra.mxu0 0
      %1905 = vmatpush.bf16.msra.mxu0 %v1850
      %1906 = vmatpush.bf16.msra.mxu0 %v1847
      %1907 = vmatmul.bf16.gmra.mxu0 %v1869
      %v1908 = vpop.f32.mrf.mxu0
      %v1909 = vadd.f32 %v1856, %v1908
      %v1910 = vpop.f32.mrf.mxu0
      %v1911 = vadd.f32 %v1861, %v1910
      %1912 = vdwg.mxu0
      %1913 = vst [vmem:[%s440] sm:$0xff] %v1881
      %1914 = vst [vmem:[%s440 + $0x8] sm:$0xff] %v1895
      %1915 = vst.msk [vmem:[%s440 + $0x10] sm:$0xff] %vm1094, %v1909
      %1916 = vst [vmem:[%s440 + $0x18] sm:$0xff] %v1883
      %1917 = vst [vmem:[%s440 + $0x20] sm:$0xff] %v1897
      %1918 = vst.msk [vmem:[%s440 + $0x28] sm:$0xff] %vm1094, %v1911
      %p1919 = scmp.lt.s32.totalorder %s24, 1
      %s1920 = scalar_select %p1919, %s24, 1
      %s1921 = smul.addr %s1920, 6
      %s1922 = smul.addr %s1921, 8
      %s1923 = scalar_lea.vmem %s13, %s1922
      // Predicated region
      $region73: #{_proposal_network_core.1} parent=71 // pred_check
        %p1924 = pneg %p320
      $region74: #{_proposal_network_core.1} parent=71 // pred_check_branch
        %1926 = sbr.rel (%p1924) target = $region76
      $region75: #{_proposal_network_core.1} parent=71 // pred_region
        _
      $region76: #{_proposal_network_core.1} parent=71 // pred_fallthru
        _
    $region72: #{_proposal_network_core.1} parent=5 // pred_fallthru
      _
    %p1927 = scmp.le.s32.totalorder 2, %s19
    // Predicated region
    $region77: #{_proposal_network_core.1} parent=5 // pred_check
      %p1928 = pneg %p1927
    $region78: #{_proposal_network_core.1} parent=5 // pred_check_branch
      %1930 = sbr.rel (%p1928) target = $region80
    $region79: #{_proposal_network_core.1} parent=5 // pred_region
      %s1931 = ssub.s32 %s19, 2
      // Predicated region
      $region81: #{_proposal_network_core.1} parent=79 // pred_check
        %p1932 = pneg %p326
      $region82: #{_proposal_network_core.1} parent=79 // pred_check_branch
        %1934 = sbr.rel (%p1932) target = $region84
      $region83: #{_proposal_network_core.1} parent=79 // pred_region
        %p1935 = scmp.lt.s32.totalorder %s25, 1
        %s1936 = scalar_select %p1935, %s25, 1
        %s1937 = smul.addr %s1936, 6
        %s1938 = smul.addr %s1937, 8
        %s1939 = scalar_lea.vmem %s13, %s1938
      $region84: #{_proposal_network_core.1} parent=79 // pred_fallthru
        _
    $region80: #{_proposal_network_core.1} parent=5 // pred_fallthru
      _
  $region6: #{_proposal_network_core.1} parent=0 // loop_footer
    %s23 = sadd.s32 1, %s19
  $region7: #{_proposal_network_core.1} parent=0 // loop_footer_branch
    %18 = sbr.rel target = $region3
  $region8: #{_proposal_network_core.1} parent=0 // loop_exit
    _

</llo_original>
